<compile_context>
chip_gen: v7x
topology: tpu7x:2x2x1
jax: 0.10.0
libtpu: 0.0.40
codegen_flags: <defaults>
</compile_context>

<pallas_src>
import math
import jax
import jax.numpy as jnp
from jax.experimental import pallas as pl
from jax.experimental.pallas import tpu as pltpu

BN_EPS = 1e-5


def _gelu(x):
    # TODO(synk): torch nn.GELU default is exact-erf; tanh approximation used here (EUP friendly).
    return 0.5 * x * (1.0 + jnp.tanh(0.7978845608028654 * (x + 0.044715 * x * x * x)))


def _dot(a, w):
    # bf16 MXU matmul with f32 accumulation; weights are stored in bf16.
    return jnp.dot(a.astype(jnp.bfloat16), w, preferred_element_type=jnp.float32)


def _round_up(x, m):
    return (x + m - 1) // m * m


def _cdiv(a, b):
    return -(-a // b)


# ------------------------------- Pallas kernels --------------------------------

def _embed_start_kernel(xyz_ref, xyzk_ref, xk_ref,
                        w1x, w1f, w2, w3, nbs, nbb, ppw, mw1, mb1, mw2, vw0,
                        pe_ref, x1_ref, h_ref):
    """Fused: merged nbr/pe embedding chain (+max over K), nbr_bn, pe_proj(+folded pe_bn),
    ResLFE mlp-FFN residual, and the depth-0 prologue (x1 = x + pe, h = x1 @ vfr_w[0])."""
    tn, kk, _ = xyzk_ref.shape
    dim = h_ref.shape[1]

    # relative positions in f32 (avoid bf16 cancellation), flattened to per-neighbor rows
    rel = (xyzk_ref[...] - xyz_ref[...][:, None, :]).reshape(tn * kk, 3)

    # merged block-diagonal nbr/pe chain; in-chain BN scales are folded into the weights.
    hh = _gelu(_dot(rel, w1x[...]) + _dot(xk_ref[...], w1f[...]))   # (tn*kk, h1+g1)
    hh = _gelu(_dot(hh, w2[...]))                                   # (tn*kk, h2+g2)
    hh = _dot(hh, w3[...])                                          # (tn*kk, dim+pe_out)
    mx = jnp.max(hh.reshape(tn, kk, -1), axis=1)                    # max over K neighbors

    xf = mx[:, :dim] * nbs[...] + nbb[...]                          # nbr_bn (affine after max)
    pe = _dot(mx[:, dim:], ppw[...])                                # pe_proj (pe_bn folded)

    m = _gelu(_dot(xf, mw1[...]) + mb1[...])                        # ResLFE mlp FFN
    xf = xf + _dot(m, mw2[...])                                     # (mlp BN folded into mw2)

    x1 = xf + pe                                                    # prologue of iteration 0
    pe_ref[...] = pe
    x1_ref[...] = x1
    h_ref[...] = _dot(x1, vw0[...]).astype(jnp.bfloat16)


def _vfr_ffn_body(x1, h, g, vbs, vbb, fw1, fb1, fw2):
    """knn_edge_maxpooling (max_j h[knn]-h == max_j(g)-h) -> VFR BN -> residual -> FFN -> residual."""
    pooled = jnp.max(g, axis=1).astype(jnp.float32) - h.astype(jnp.float32)
    x2 = x1 + pooled * vbs + vbb
    f = _gelu(_dot(x2, fw1) + fb1)
    return x2 + _dot(f, fw2)                                        # FFN output BN folded in fw2


def _block_step_kernel(pe_ref, x1_ref, h_ref, g_ref,
                       vbs, vbb, fw1, fb1, fw2, nw,
                       x1o_ref, ho_ref):
    """One depth iteration + the next iteration's prologue (x + pe, next VFR linear)."""
    x3 = _vfr_ffn_body(x1_ref[...], h_ref[...], g_ref[...],
                       vbs[...], vbb[...], fw1[...], fb1[...], fw2[...])
    x1n = x3 + pe_ref[...]
    x1o_ref[...] = x1n
    ho_ref[...] = _dot(x1n, nw[...]).astype(jnp.bfloat16)


def _block_final_kernel(x1_ref, h_ref, g_ref,
                        vbs, vbb, fw1, fb1, fw2, pw,
                        o_ref):
    """Last depth iteration fused with postproj (BN scale folded into the head weight)."""
    x3 = _vfr_ffn_body(x1_ref[...], h_ref[...], g_ref[...],
                       vbs[...], vbb[...], fw1[...], fb1[...], fw2[...])
    o_ref[...] = _dot(x3, pw[...])


# ------------------------------ BlockSpec helpers ------------------------------

def _param_spec(a):
    nd = a.ndim
    return pl.BlockSpec(a.shape, lambda *_: (0,) * nd)


_CPARAMS = pltpu.CompilerParams(dimension_semantics=("parallel",),
                                vmem_limit_bytes=32 * 1024 * 1024)


# ------------------------------ parameters (deterministic) ------------------------------

def make_params(key, cfg):
    dim, nbr_hid, pe_out, in_ch = cfg["dim"], cfg["nbr_hid"], cfg["pe_out"], cfg["in_ch"]
    mlp_hid = round(dim * cfg["mlp_ratio"])
    depth, head_dim = cfg["depth"], cfg["head_dim"]
    keys = iter(jax.random.split(key, 64))

    def w(cin, cout, scale=0.1):
        return jax.random.normal(next(keys), (cin, cout), jnp.float32) * scale

    def bn_scale(gamma):
        # eval-mode BatchNorm1d with fresh running stats (mean=0, var=1, beta=0):
        # y = gamma / sqrt(1 + eps) * x.  With a real checkpoint, fold mean/var/beta into
        # the adjacent weight / affine the same way.
        return gamma / math.sqrt(1.0 + BN_EPS)

    def block_diag(a, b):
        ra, ca = a.shape
        rb, cb = b.shape
        return jnp.concatenate(
            [jnp.concatenate([a, jnp.zeros((ra, cb), a.dtype)], axis=1),
             jnp.concatenate([jnp.zeros((rb, ca), b.dtype), b], axis=1)], axis=0)

    h1, h2 = nbr_hid // 2, nbr_hid          # nbr_embed hidden dims
    g1, g2 = pe_out // 4, pe_out // 2       # pe_embed hidden dims

    p = {}
    # merged nbr/pe embedding chain: columns [0:h*] = nbr path, [h*:] = pe path.
    a1 = w(3 + in_ch, h1) * bn_scale(1.0)   # nbr Linear(7, h1)  (+folded BN scale)
    b1 = w(3, g1) * bn_scale(1.0)           # pe  Linear(3, g1)  (+folded BN scale)
    p["emb_w1x"] = jnp.concatenate([a1[:3], b1], axis=1).astype(jnp.bfloat16)
    p["emb_w1f"] = jnp.concatenate([a1[3:], jnp.zeros((in_ch, g1), jnp.float32)],
                                   axis=1).astype(jnp.bfloat16)
    p["emb_w2"] = block_diag(w(h1, h2) * bn_scale(1.0),
                             w(g1, g2) * bn_scale(1.0)).astype(jnp.bfloat16)
    p["emb_w3"] = block_diag(w(h2, dim), w(g2, pe_out)).astype(jnp.bfloat16)
    # nbr_bn (gamma=0.8) stays an explicit affine (it follows the max over K)
    p["nbr_bn_s"] = jnp.full((1, dim), bn_scale(0.8), jnp.float32)
    p["nbr_bn_b"] = jnp.zeros((1, dim), jnp.float32)
    # pe_proj with pe_bn (gamma=0.2) folded into its columns
    p["pe_proj_w"] = (w(pe_out, dim) * bn_scale(0.2)).astype(jnp.bfloat16)

    def ffn(gamma):
        # Linear(dim, hid) [bias], GELU, Linear(hid, dim, bias=False), BN(gamma) folded in.
        return ((w(dim, mlp_hid)).astype(jnp.bfloat16),
                jax.random.normal(next(keys), (1, mlp_hid), jnp.float32) * 0.02,
                (w(mlp_hid, dim) * bn_scale(gamma)).astype(jnp.bfloat16))

    p["mlp"] = ffn(0.2)                               # ResLFE mlp (BN weight init 0.2)
    p["ffn"] = [ffn(0.0) for _ in range(depth)]       # per-depth FFNs (BN weight init 0.0)
    p["vfr_w"] = [w(dim, dim).astype(jnp.bfloat16) for _ in range(depth)]
    p["vfr_bn_s"] = [jnp.full((1, dim), bn_scale(0.0), jnp.float32) for _ in range(depth)]
    p["vfr_bn_b"] = [jnp.zeros((1, dim), jnp.float32) for _ in range(depth)]
    # postproj: BN(gamma=sqrt(dims[0]/dim)) folded into the rows of the bias-free head weight
    p["post_w"] = (w(dim, head_dim) * bn_scale(math.sqrt(cfg["dim0"] / dim))
                   ).astype(jnp.bfloat16)
    p["depth"] = depth
    return p


# ------------------------------ Stage forward (eval) ------------------------------

def stage_forward(params, x, xyz, indices, pts_list=None, *, tile_target=None):
    """x: (N, C) point features; xyz: (N, 3); indices: list whose last entry is knn (N, K)."""
    p = params
    depth = p["depth"]
    assert depth >= 1
    knn = indices[-1]                          # torch pops this; we leave the caller's list alone
    N, K = knn.shape
    C = x.shape[1]
    dim = p["post_w"].shape[0]
    head_dim = p["post_w"].shape[1]

    # ---- tile sizing derived from N (minimal tail padding, VMEM-safe on all generations) ----
    if tile_target is None:
        tile_target = max(256, min(1024, 8192 // _round_up(K, 8)))
    grid_n = max(1, _cdiv(N, tile_target))
    if grid_n == 1 and N >= 128:
        grid_n = 2                             # v7x: keep both TensorCores busy
    tile_n = _round_up(_cdiv(N, grid_n), 32)
    Np = grid_n * tile_n
    tile_e = max(16, tile_n // 4)              # embed kernel works on tn*K rows -> smaller tile
    grid_e = Np // tile_e

    if Np != N:
        pad = Np - N
        x = jnp.pad(x, ((0, pad), (0, 0)))
        xyz = jnp.pad(xyz, ((0, pad), (0, 0)))
        knn = jnp.pad(knn, ((0, pad), (0, 0)))  # padded rows gather valid row 0; sliced off later

    # ---- XLA glue: neighbor gathers (kept in XLA; see TODO at top) ----
    xyzk = xyz[knn]                                        # (Np, K, 3) f32
    xk = x.astype(jnp.bfloat16)[knn].reshape(Np * K, C)    # (Np*K, C)  bf16

    # --- kernel 1: embeddings + mlp residual + first VFR linear ---
    embed_params = (p["emb_w1x"], p["emb_w1f"], p["emb_w2"], p["emb_w3"],
                    p["nbr_bn_s"], p["nbr_bn_b"], p["pe_proj_w"],
                    p["mlp"][0], p["mlp"][1], p["mlp"][2], p["vfr_w"][0])
    pe, x1, h = pl.pallas_call(
        _embed_start_kernel,
        out_shape=(jax.ShapeDtypeStruct((Np, dim), jnp.float32),
                   jax.ShapeDtypeStruct((Np, dim), jnp.float32),
                   jax.ShapeDtypeStruct((Np, dim), jnp.bfloat16)),
        grid=(grid_e,),
        in_specs=[pl.BlockSpec((tile_e, 3), lambda j: (j, 0)),
                  pl.BlockSpec((tile_e, K, 3), lambda j: (j, 0, 0)),
                  pl.BlockSpec((tile_e * K, C), lambda j: (j, 0))]
                 + [_param_spec(a) for a in embed_params],
        out_specs=[pl.BlockSpec((tile_e, dim), lambda j: (j, 0))] * 3,
        compiler_params=_CPARAMS,
    )(xyz, xyzk, xk, *embed_params)

    # --- depth loop: one fused kernel per iteration (last one also applies the head) ---
    out = None
    for d in range(depth):
        g = h[knn]                                         # (Np, K, dim) bf16 XLA gather
        fw1, fb1, fw2 = p["ffn"][d]
        vbs, vbb = p["vfr_bn_s"][d], p["vfr_bn_b"][d]
        if d + 1 < depth:
            step_params = (vbs, vbb, fw1, fb1, fw2, p["vfr_w"][d + 1])
            x1, h = pl.pallas_call(
                _block_step_kernel,
                out_shape=(jax.ShapeDtypeStruct((Np, dim), jnp.float32),
                           jax.ShapeDtypeStruct((Np, dim), jnp.bfloat16)),
                grid=(grid_n,),
                in_specs=[pl.BlockSpec((tile_n, dim), lambda j: (j, 0)),
                          pl.BlockSpec((tile_n, dim), lambda j: (j, 0)),
                          pl.BlockSpec((tile_n, dim), lambda j: (j, 0)),
                          pl.BlockSpec((tile_n, K, dim), lambda j: (j, 0, 0))]
                         + [_param_spec(a) for a in step_params],
                out_specs=[pl.BlockSpec((tile_n, dim), lambda j: (j, 0))] * 2,
                compiler_params=_CPARAMS,
            )(pe, x1, h, g, *step_params)
        else:
            fin_params = (vbs, vbb, fw1, fb1, fw2, p["post_w"])
            out = pl.pallas_call(
                _block_final_kernel,
                out_shape=jax.ShapeDtypeStruct((Np, head_dim), jnp.float32),
                grid=(grid_n,),
                in_specs=[pl.BlockSpec((tile_n, dim), lambda j: (j, 0)),
                          pl.BlockSpec((tile_n, dim), lambda j: (j, 0)),
                          pl.BlockSpec((tile_n, K, dim), lambda j: (j, 0, 0))]
                         + [_param_spec(a) for a in fin_params],
                out_specs=pl.BlockSpec((tile_n, head_dim), lambda j: (j, 0)),
                compiler_params=_CPARAMS,
            )(x1, h, g, *fin_params)

    # training-only branch (cor_head / sem_sup / closs) is skipped in eval mode.
    return out[:N], None, None


if __name__ == "__main__":
    N, K, C_IN = 64, 8, 4   # 3 (relative xyz) + 4 (features) = 7 = nbr_in_dim
    cfg = dict(dim=32, dim0=32, nbr_hid=16, pe_out=16, mlp_ratio=2.0,
               depth=2, head_dim=32, in_ch=C_IN)

    key = jax.random.PRNGKey(0)
    kp, kx, kxyz, kknn = jax.random.split(key, 4)
    params = make_params(kp, cfg)
    x = jax.random.normal(kx, (N, C_IN), jnp.float32)
    xyz = jax.random.normal(kxyz, (N, 3), jnp.float32)
    knn = jax.random.randint(kknn, (N, K), 0, N, jnp.int32)

    indices = [knn]
    out, sub_spa, sub_sem = stage_forward(params, x, xyz, indices, None)
    out = jax.block_until_ready(out)
    assert out.shape == (N, cfg["head_dim"]), out.shape
    assert bool(jnp.all(jnp.isfinite(out)))
    assert len(indices) == 1   # caller's indices list is not mutated
    print("KERNEL_OK")
</pallas_src>

<mosaic_0001>
module attributes {stable_mosaic.version = 11 : i64} {
  func.func @_embed_start_kernel(%arg0: i32, %arg1: memref<16x3xf32, #tpu.memory_space<vmem>>, %arg2: memref<16x8x3xf32, #tpu.memory_space<vmem>>, %arg3: memref<128x4xbf16, #tpu.memory_space<vmem>>, %arg4: memref<3x12xbf16, #tpu.memory_space<vmem>>, %arg5: memref<4x12xbf16, #tpu.memory_space<vmem>>, %arg6: memref<12x24xbf16, #tpu.memory_space<vmem>>, %arg7: memref<24x48xbf16, #tpu.memory_space<vmem>>, %arg8: memref<1x32xf32, #tpu.memory_space<vmem>>, %arg9: memref<1x32xf32, #tpu.memory_space<vmem>>, %arg10: memref<16x32xbf16, #tpu.memory_space<vmem>>, %arg11: memref<32x64xbf16, #tpu.memory_space<vmem>>, %arg12: memref<1x64xf32, #tpu.memory_space<vmem>>, %arg13: memref<64x32xbf16, #tpu.memory_space<vmem>>, %arg14: memref<32x32xbf16, #tpu.memory_space<vmem>>, %arg15: memref<16x32xf32, #tpu.memory_space<vmem>>, %arg16: memref<16x32xf32, #tpu.memory_space<vmem>>, %arg17: memref<16x32xbf16, #tpu.memory_space<vmem>>) attributes {dimension_semantics = [#tpu.dimension_semantics<parallel>], iteration_bounds = array<i64: 4>, scalar_prefetch = 0 : i64, scratch_operands = 0 : i64, tpu.core_type = #tpu.core_type<tc>, window_params = [{transform_indices = @transform_0, window_bounds = array<i64: 16, 3>}, {transform_indices = @transform_1, window_bounds = array<i64: 16, 8, 3>}, {transform_indices = @transform_2, window_bounds = array<i64: 128, 4>}, {pipeline_mode = #tpu.pipeline_mode<synchronous>, transform_indices = @transform_3, window_bounds = array<i64: 3, 12>}, {pipeline_mode = #tpu.pipeline_mode<synchronous>, transform_indices = @transform_4, window_bounds = array<i64: 4, 12>}, {pipeline_mode = #tpu.pipeline_mode<synchronous>, transform_indices = @transform_5, window_bounds = array<i64: 12, 24>}, {pipeline_mode = #tpu.pipeline_mode<synchronous>, transform_indices = @transform_6, window_bounds = array<i64: 24, 48>}, {pipeline_mode = #tpu.pipeline_mode<synchronous>, transform_indices = @transform_7, window_bounds = array<i64: 1, 32>}, {pipeline_mode = #tpu.pipeline_mode<synchronous>, transform_indices = @transform_8, window_bounds = array<i64: 1, 32>}, {pipeline_mode = #tpu.pipeline_mode<synchronous>, transform_indices = @transform_9, window_bounds = array<i64: 16, 32>}, {pipeline_mode = #tpu.pipeline_mode<synchronous>, transform_indices = @transform_10, window_bounds = array<i64: 32, 64>}, {pipeline_mode = #tpu.pipeline_mode<synchronous>, transform_indices = @transform_11, window_bounds = array<i64: 1, 64>}, {pipeline_mode = #tpu.pipeline_mode<synchronous>, transform_indices = @transform_12, window_bounds = array<i64: 64, 32>}, {pipeline_mode = #tpu.pipeline_mode<synchronous>, transform_indices = @transform_13, window_bounds = array<i64: 32, 32>}, {transform_indices = @transform_14, window_bounds = array<i64: 16, 32>}, {transform_indices = @transform_15, window_bounds = array<i64: 16, 32>}, {transform_indices = @transform_16, window_bounds = array<i64: 16, 32>}]} {
    %c0 = arith.constant 0 : index
    %c0_0 = arith.constant 0 : index
    %c0_1 = arith.constant 0 : index
    %0 = vector.load %arg2[%c0, %c0_0, %c0_1] : memref<16x8x3xf32, #tpu.memory_space<vmem>>, vector<16x8x3xf32>
    %c0_2 = arith.constant 0 : index
    %c0_3 = arith.constant 0 : index
    %1 = vector.load %arg1[%c0_2, %c0_3] : memref<16x3xf32, #tpu.memory_space<vmem>>, vector<16x3xf32>
    %2 = vector.shape_cast %1 : vector<16x3xf32> to vector<16x1x3xf32>
    %3 = vector.broadcast %2 : vector<16x1x3xf32> to vector<16x8x3xf32>
    %4 = arith.subf %0, %3 : vector<16x8x3xf32>
    %5 = vector.shape_cast %4 : vector<16x8x3xf32> to vector<128x3xf32>
    %c0_4 = arith.constant 0 : index
    %c0_5 = arith.constant 0 : index
    %6 = vector.load %arg4[%c0_4, %c0_5] : memref<3x12xbf16, #tpu.memory_space<vmem>>, vector<3x12xbf16>
    %7 = arith.truncf %5 : vector<128x3xf32> to vector<128x3xbf16>
    %cst = arith.constant dense<0.000000e+00> : vector<128x12xf32>
    %8 = tpu.matmul %7, %6, %cst {dimension_numbers = #tpu.dot_dimension_numbers<[1], [0], [0], [1], [0, 0, 1, 1], [], []>} : vector<128x3xbf16>, vector<3x12xbf16>, vector<128x12xf32> -> vector<128x12xf32>
    %c0_6 = arith.constant 0 : index
    %c0_7 = arith.constant 0 : index
    %9 = vector.load %arg3[%c0_6, %c0_7] : memref<128x4xbf16, #tpu.memory_space<vmem>>, vector<128x4xbf16>
    %c0_8 = arith.constant 0 : index
    %c0_9 = arith.constant 0 : index
    %10 = vector.load %arg5[%c0_8, %c0_9] : memref<4x12xbf16, #tpu.memory_space<vmem>>, vector<4x12xbf16>
    %cst_10 = arith.constant dense<0.000000e+00> : vector<128x12xf32>
    %11 = tpu.matmul %9, %10, %cst_10 {dimension_numbers = #tpu.dot_dimension_numbers<[1], [0], [0], [1], [0, 0, 1, 1], [], []>} : vector<128x4xbf16>, vector<4x12xbf16>, vector<128x12xf32> -> vector<128x12xf32>
    %12 = arith.addf %8, %11 : vector<128x12xf32>
    %cst_11 = arith.constant 5.000000e-01 : f32
    %13 = vector.broadcast %cst_11 : f32 to vector<128x12xf32>
    %14 = arith.mulf %13, %12 : vector<128x12xf32>
    %cst_12 = arith.constant 4.471500e-02 : f32
    %15 = vector.broadcast %cst_12 : f32 to vector<128x12xf32>
    %16 = arith.mulf %15, %12 : vector<128x12xf32>
    %17 = arith.mulf %16, %12 : vector<128x12xf32>
    %18 = arith.mulf %17, %12 : vector<128x12xf32>
    %19 = arith.addf %12, %18 : vector<128x12xf32>
    %cst_13 = arith.constant 0.797884583 : f32
    %20 = vector.broadcast %cst_13 : f32 to vector<128x12xf32>
    %21 = arith.mulf %20, %19 : vector<128x12xf32>
    %22 = math.tanh %21 : vector<128x12xf32>
    %cst_14 = arith.constant 1.000000e+00 : f32
    %23 = vector.broadcast %cst_14 : f32 to vector<128x12xf32>
    %24 = arith.addf %23, %22 : vector<128x12xf32>
    %25 = arith.mulf %14, %24 : vector<128x12xf32>
    %c0_15 = arith.constant 0 : index
    %c0_16 = arith.constant 0 : index
    %26 = vector.load %arg6[%c0_15, %c0_16] : memref<12x24xbf16, #tpu.memory_space<vmem>>, vector<12x24xbf16>
    %27 = arith.truncf %25 : vector<128x12xf32> to vector<128x12xbf16>
    %cst_17 = arith.constant dense<0.000000e+00> : vector<128x24xf32>
    %28 = tpu.matmul %27, %26, %cst_17 {dimension_numbers = #tpu.dot_dimension_numbers<[1], [0], [0], [1], [0, 0, 1, 1], [], []>} : vector<128x12xbf16>, vector<12x24xbf16>, vector<128x24xf32> -> vector<128x24xf32>
    %cst_18 = arith.constant 5.000000e-01 : f32
    %29 = vector.broadcast %cst_18 : f32 to vector<128x24xf32>
    %30 = arith.mulf %29, %28 : vector<128x24xf32>
    %cst_19 = arith.constant 4.471500e-02 : f32
    %31 = vector.broadcast %cst_19 : f32 to vector<128x24xf32>
    %32 = arith.mulf %31, %28 : vector<128x24xf32>
    %33 = arith.mulf %32, %28 : vector<128x24xf32>
    %34 = arith.mulf %33, %28 : vector<128x24xf32>
    %35 = arith.addf %28, %34 : vector<128x24xf32>
    %cst_20 = arith.constant 0.797884583 : f32
    %36 = vector.broadcast %cst_20 : f32 to vector<128x24xf32>
    %37 = arith.mulf %36, %35 : vector<128x24xf32>
    %38 = math.tanh %37 : vector<128x24xf32>
    %cst_21 = arith.constant 1.000000e+00 : f32
    %39 = vector.broadcast %cst_21 : f32 to vector<128x24xf32>
    %40 = arith.addf %39, %38 : vector<128x24xf32>
    %41 = arith.mulf %30, %40 : vector<128x24xf32>
    %c0_22 = arith.constant 0 : index
    %c0_23 = arith.constant 0 : index
    %42 = vector.load %arg7[%c0_22, %c0_23] : memref<24x48xbf16, #tpu.memory_space<vmem>>, vector<24x48xbf16>
    %43 = arith.truncf %41 : vector<128x24xf32> to vector<128x24xbf16>
    %cst_24 = arith.constant dense<0.000000e+00> : vector<128x48xf32>
    %44 = tpu.matmul %43, %42, %cst_24 {dimension_numbers = #tpu.dot_dimension_numbers<[1], [0], [0], [1], [0, 0, 1, 1], [], []>} : vector<128x24xbf16>, vector<24x48xbf16>, vector<128x48xf32> -> vector<128x48xf32>
    %45 = vector.shape_cast %44 : vector<128x48xf32> to vector<16x8x48xf32>
    %cst_25 = arith.constant dense<0xFF800000> : vector<16x48xf32>
    %46 = vector.multi_reduction <maximumf>, %45, %cst_25 [1] : vector<16x8x48xf32> to vector<16x48xf32>
    %47 = vector.extract_strided_slice %46 {offsets = [0, 0], sizes = [16, 32], strides = [1, 1]} : vector<16x48xf32> to vector<16x32xf32>
    %c0_26 = arith.constant 0 : index
    %c0_27 = arith.constant 0 : index
    %48 = vector.load %arg8[%c0_26, %c0_27] : memref<1x32xf32, #tpu.memory_space<vmem>>, vector<1x32xf32>
    %49 = vector.broadcast %48 : vector<1x32xf32> to vector<16x32xf32>
    %50 = arith.mulf %47, %49 : vector<16x32xf32>
    %c0_28 = arith.constant 0 : index
    %c0_29 = arith.constant 0 : index
    %51 = vector.load %arg9[%c0_28, %c0_29] : memref<1x32xf32, #tpu.memory_space<vmem>>, vector<1x32xf32>
    %52 = vector.broadcast %51 : vector<1x32xf32> to vector<16x32xf32>
    %53 = arith.addf %50, %52 : vector<16x32xf32>
    %54 = vector.extract_strided_slice %46 {offsets = [0, 32], sizes = [16, 16], strides = [1, 1]} : vector<16x48xf32> to vector<16x16xf32>
    %c0_30 = arith.constant 0 : index
    %c0_31 = arith.constant 0 : index
    %55 = vector.load %arg10[%c0_30, %c0_31] : memref<16x32xbf16, #tpu.memory_space<vmem>>, vector<16x32xbf16>
    %56 = arith.truncf %54 : vector<16x16xf32> to vector<16x16xbf16>
    %cst_32 = arith.constant dense<0.000000e+00> : vector<16x32xf32>
    %57 = tpu.matmul %56, %55, %cst_32 {dimension_numbers = #tpu.dot_dimension_numbers<[1], [0], [0], [1], [0, 0, 1, 1], [], []>} : vector<16x16xbf16>, vector<16x32xbf16>, vector<16x32xf32> -> vector<16x32xf32>
    %c0_33 = arith.constant 0 : index
    %c0_34 = arith.constant 0 : index
    %58 = vector.load %arg11[%c0_33, %c0_34] : memref<32x64xbf16, #tpu.memory_space<vmem>>, vector<32x64xbf16>
    %59 = arith.truncf %53 : vector<16x32xf32> to vector<16x32xbf16>
    %cst_35 = arith.constant dense<0.000000e+00> : vector<16x64xf32>
    %60 = tpu.matmul %59, %58, %cst_35 {dimension_numbers = #tpu.dot_dimension_numbers<[1], [0], [0], [1], [0, 0, 1, 1], [], []>} : vector<16x32xbf16>, vector<32x64xbf16>, vector<16x64xf32> -> vector<16x64xf32>
    %c0_36 = arith.constant 0 : index
    %c0_37 = arith.constant 0 : index
    %61 = vector.load %arg12[%c0_36, %c0_37] : memref<1x64xf32, #tpu.memory_space<vmem>>, vector<1x64xf32>
    %62 = vector.broadcast %61 : vector<1x64xf32> to vector<16x64xf32>
    %63 = arith.addf %60, %62 : vector<16x64xf32>
    %cst_38 = arith.constant 5.000000e-01 : f32
    %64 = vector.broadcast %cst_38 : f32 to vector<16x64xf32>
    %65 = arith.mulf %64, %63 : vector<16x64xf32>
    %cst_39 = arith.constant 4.471500e-02 : f32
    %66 = vector.broadcast %cst_39 : f32 to vector<16x64xf32>
    %67 = arith.mulf %66, %63 : vector<16x64xf32>
    %68 = arith.mulf %67, %63 : vector<16x64xf32>
    %69 = arith.mulf %68, %63 : vector<16x64xf32>
    %70 = arith.addf %63, %69 : vector<16x64xf32>
    %cst_40 = arith.constant 0.797884583 : f32
    %71 = vector.broadcast %cst_40 : f32 to vector<16x64xf32>
    %72 = arith.mulf %71, %70 : vector<16x64xf32>
    %73 = math.tanh %72 : vector<16x64xf32>
    %cst_41 = arith.constant 1.000000e+00 : f32
    %74 = vector.broadcast %cst_41 : f32 to vector<16x64xf32>
    %75 = arith.addf %74, %73 : vector<16x64xf32>
    %76 = arith.mulf %65, %75 : vector<16x64xf32>
    %c0_42 = arith.constant 0 : index
    %c0_43 = arith.constant 0 : index
    %77 = vector.load %arg13[%c0_42, %c0_43] : memref<64x32xbf16, #tpu.memory_space<vmem>>, vector<64x32xbf16>
    %78 = arith.truncf %76 : vector<16x64xf32> to vector<16x64xbf16>
    %cst_44 = arith.constant dense<0.000000e+00> : vector<16x32xf32>
    %79 = tpu.matmul %78, %77, %cst_44 {dimension_numbers = #tpu.dot_dimension_numbers<[1], [0], [0], [1], [0, 0, 1, 1], [], []>} : vector<16x64xbf16>, vector<64x32xbf16>, vector<16x32xf32> -> vector<16x32xf32>
    %80 = arith.addf %53, %79 : vector<16x32xf32>
    %81 = arith.addf %80, %57 : vector<16x32xf32>
    %c0_45 = arith.constant 0 : index
    %c0_46 = arith.constant 0 : index
    %82 = vector.load %arg15[%c0_45, %c0_46] : memref<16x32xf32, #tpu.memory_space<vmem>>, vector<16x32xf32>
    tpu.vector_store %arg15[%c0_45, %c0_46], %57 {strides = array<i32>} : memref<16x32xf32, #tpu.memory_space<vmem>>, vector<16x32xf32>,
    %c0_47 = arith.constant 0 : index
    %c0_48 = arith.constant 0 : index
    %83 = vector.load %arg16[%c0_47, %c0_48] : memref<16x32xf32, #tpu.memory_space<vmem>>, vector<16x32xf32>
    tpu.vector_store %arg16[%c0_47, %c0_48], %81 {strides = array<i32>} : memref<16x32xf32, #tpu.memory_space<vmem>>, vector<16x32xf32>,
    %c0_49 = arith.constant 0 : index
    %c0_50 = arith.constant 0 : index
    %84 = vector.load %arg14[%c0_49, %c0_50] : memref<32x32xbf16, #tpu.memory_space<vmem>>, vector<32x32xbf16>
    %85 = arith.truncf %81 : vector<16x32xf32> to vector<16x32xbf16>
    %cst_51 = arith.constant dense<0.000000e+00> : vector<16x32xf32>
    %86 = tpu.matmul %85, %84, %cst_51 {dimension_numbers = #tpu.dot_dimension_numbers<[1], [0], [0], [1], [0, 0, 1, 1], [], []>} : vector<16x32xbf16>, vector<32x32xbf16>, vector<16x32xf32> -> vector<16x32xf32>
    %87 = arith.truncf %86 : vector<16x32xf32> to vector<16x32xbf16>
    %c0_52 = arith.constant 0 : index
    %c0_53 = arith.constant 0 : index
    %88 = vector.load %arg17[%c0_52, %c0_53] : memref<16x32xbf16, #tpu.memory_space<vmem>>, vector<16x32xbf16>
    tpu.vector_store %arg17[%c0_52, %c0_53], %87 {strides = array<i32>} : memref<16x32xbf16, #tpu.memory_space<vmem>>, vector<16x32xbf16>,
    return
  }
  func.func @transform_0(%arg0: i32) -> (i32, i32) {
    %c0_i32 = arith.constant 0 : i32
    %c0_i32_0 = arith.constant 0 : i32
    return %arg0, %c0_i32 : i32, i32
  }
  func.func @transform_1(%arg0: i32) -> (i32, i32, i32) {
    %c0_i32 = arith.constant 0 : i32
    %c0_i32_0 = arith.constant 0 : i32
    %c0_i32_1 = arith.constant 0 : i32
    return %arg0, %c0_i32, %c0_i32_0 : i32, i32, i32
  }
  func.func @transform_2(%arg0: i32) -> (i32, i32) {
    %c0_i32 = arith.constant 0 : i32
    %c0_i32_0 = arith.constant 0 : i32
    return %arg0, %c0_i32 : i32, i32
  }
  func.func @transform_3(%arg0: i32) -> (i32, i32) {
    %c0_i32 = arith.constant 0 : i32
    %c0_i32_0 = arith.constant 0 : i32
    %c0_i32_1 = arith.constant 0 : i32
    return %c0_i32, %c0_i32_0 : i32, i32
  }
  func.func @transform_4(%arg0: i32) -> (i32, i32) {
    %c0_i32 = arith.constant 0 : i32
    %c0_i32_0 = arith.constant 0 : i32
    %c0_i32_1 = arith.constant 0 : i32
    return %c0_i32, %c0_i32_0 : i32, i32
  }
  func.func @transform_5(%arg0: i32) -> (i32, i32) {
    %c0_i32 = arith.constant 0 : i32
    %c0_i32_0 = arith.constant 0 : i32
    %c0_i32_1 = arith.constant 0 : i32
    return %c0_i32, %c0_i32_0 : i32, i32
  }
  func.func @transform_6(%arg0: i32) -> (i32, i32) {
    %c0_i32 = arith.constant 0 : i32
    %c0_i32_0 = arith.constant 0 : i32
    %c0_i32_1 = arith.constant 0 : i32
    return %c0_i32, %c0_i32_0 : i32, i32
  }
  func.func @transform_7(%arg0: i32) -> (i32, i32) {
    %c0_i32 = arith.constant 0 : i32
    %c0_i32_0 = arith.constant 0 : i32
    %c0_i32_1 = arith.constant 0 : i32
    return %c0_i32, %c0_i32_0 : i32, i32
  }
  func.func @transform_8(%arg0: i32) -> (i32, i32) {
    %c0_i32 = arith.constant 0 : i32
    %c0_i32_0 = arith.constant 0 : i32
    %c0_i32_1 = arith.constant 0 : i32
    return %c0_i32, %c0_i32_0 : i32, i32
  }
  func.func @transform_9(%arg0: i32) -> (i32, i32) {
    %c0_i32 = arith.constant 0 : i32
    %c0_i32_0 = arith.constant 0 : i32
    %c0_i32_1 = arith.constant 0 : i32
    return %c0_i32, %c0_i32_0 : i32, i32
  }
  func.func @transform_10(%arg0: i32) -> (i32, i32) {
    %c0_i32 = arith.constant 0 : i32
    %c0_i32_0 = arith.constant 0 : i32
    %c0_i32_1 = arith.constant 0 : i32
    return %c0_i32, %c0_i32_0 : i32, i32
  }
  func.func @transform_11(%arg0: i32) -> (i32, i32) {
    %c0_i32 = arith.constant 0 : i32
    %c0_i32_0 = arith.constant 0 : i32
    %c0_i32_1 = arith.constant 0 : i32
    return %c0_i32, %c0_i32_0 : i32, i32
  }
  func.func @transform_12(%arg0: i32) -> (i32, i32) {
    %c0_i32 = arith.constant 0 : i32
    %c0_i32_0 = arith.constant 0 : i32
    %c0_i32_1 = arith.constant 0 : i32
    return %c0_i32, %c0_i32_0 : i32, i32
  }
  func.func @transform_13(%arg0: i32) -> (i32, i32) {
    %c0_i32 = arith.constant 0 : i32
    %c0_i32_0 = arith.constant 0 : i32
    %c0_i32_1 = arith.constant 0 : i32
    return %c0_i32, %c0_i32_0 : i32, i32
  }
  func.func @transform_14(%arg0: i32) -> (i32, i32) {
    %c0_i32 = arith.constant 0 : i32
    %c0_i32_0 = arith.constant 0 : i32
    return %arg0, %c0_i32 : i32, i32
  }
  func.func @transform_15(%arg0: i32) -> (i32, i32) {
    %c0_i32 = arith.constant 0 : i32
    %c0_i32_0 = arith.constant 0 : i32
    return %arg0, %c0_i32 : i32, i32
  }
  func.func @transform_16(%arg0: i32) -> (i32, i32) {
    %c0_i32 = arith.constant 0 : i32
    %c0_i32_0 = arith.constant 0 : i32
    return %arg0, %c0_i32 : i32, i32
  }
}

</mosaic_0001>

<llo_original>
// kernel: tpu_custom_call.1
$region0: #{tpu_custom_call.1}
  #allocation0 [shape = 'u32[]', space=smem, size = 0x4, offset = 0x4, fixed_abs, tag = 'smem constant byte address 0x4 - core index']
  #allocation1 [shape = 'u32[144,128]{1,0:T(1,128)}', space=vmem, size = 0x12000, scoped, tag = 'internal scratch']
  %s0 = inlined_call_operand.vmem [shape: f32[64,3], index: 0, kind: input, shape index: {}]
  %s1 = inlined_call_operand.vmem [shape: f32[64,8,3], index: 1, kind: input, shape index: {}]
  %s2 = inlined_call_operand.vmem [shape: bf16[512,4], index: 2, kind: input, shape index: {}]
  %s3 = inlined_call_operand.vmem [shape: bf16[3,12], index: 3, kind: input, shape index: {}]
  %s4 = inlined_call_operand.vmem [shape: bf16[4,12], index: 4, kind: input, shape index: {}]
  %s5 = inlined_call_operand.vmem [shape: bf16[12,24], index: 5, kind: input, shape index: {}]
  %s6 = inlined_call_operand.vmem [shape: bf16[24,48], index: 6, kind: input, shape index: {}]
  %s7 = inlined_call_operand.vmem [shape: f32[1,32], index: 7, kind: input, shape index: {}]
  %s8 = inlined_call_operand.vmem [shape: f32[1,32], index: 8, kind: input, shape index: {}]
  %s9 = inlined_call_operand.vmem [shape: bf16[16,32], index: 9, kind: input, shape index: {}]
  %s10 = inlined_call_operand.vmem [shape: bf16[32,64], index: 10, kind: input, shape index: {}]
  %s11 = inlined_call_operand.vmem [shape: f32[1,64], index: 11, kind: input, shape index: {}]
  %s12 = inlined_call_operand.vmem [shape: bf16[64,32], index: 12, kind: input, shape index: {}]
  %s13 = inlined_call_operand.vmem [shape: bf16[32,32], index: 13, kind: input, shape index: {}]
  %s14 = inlined_call_operand.vmem [shape: f32[64,32], index: 14, kind: output, shape index: {0}]
  %s15 = inlined_call_operand.vmem [shape: f32[64,32], index: 15, kind: output, shape index: {1}]
  %s16 = inlined_call_operand.vmem [shape: bf16[64,32], index: 16, kind: output, shape index: {2}]
  %17 = xla_tuple %s14, %s15, %s16
  %s18 = sld [smem:[#allocation0]]
  $region105: #{tpu_custom_call.1} parent=0
    _
  %s20 = ssub.s32 1, %s18
  %s21 = scalar_select 0, %s20, %s18
  loop: start=0, step=1, limit=6
  $region2: #{tpu_custom_call.1} parent=0 // loop_pre_header
    _
  $region3: #{tpu_custom_call.1} parent=0 // loop_header
    %s23 = sphi 0, %s27
    %p24 = scmp.ge.s32.totalorder %s23, 6
    %s33 = sphi 0, %s35
    %s36 = sphi 0, %s33
    %s37 = sphi 0, %s36
    %s53 = sphi 0, %s37
    %s59 = sphi 0, %s61
    %s62 = sphi 0, %s59
    %s63 = sphi 0, %s62
    %s79 = sphi 0, %s63
    %s85 = sphi 0, %s87
    %s88 = sphi 0, %s85
    %s89 = sphi 0, %s88
    %s105 = sphi 0, %s89
    %s109 = sphi 0, %s109
    %s111 = sphi 0, %s109
    %s112 = sphi 0, %s111
    %s126 = sphi 0, %s112
    %s130 = sphi 0, %s130
    %s132 = sphi 0, %s130
    %s133 = sphi 0, %s132
    %s147 = sphi 0, %s133
    %s151 = sphi 0, %s151
    %s153 = sphi 0, %s151
    %s154 = sphi 0, %s153
    %s168 = sphi 0, %s154
    %s172 = sphi 0, %s172
    %s174 = sphi 0, %s172
    %s175 = sphi 0, %s174
    %s189 = sphi 0, %s175
    %s193 = sphi 0, %s193
    %s195 = sphi 0, %s193
    %s196 = sphi 0, %s195
    %s210 = sphi 0, %s196
    %s214 = sphi 0, %s214
    %s216 = sphi 0, %s214
    %s217 = sphi 0, %s216
    %s231 = sphi 0, %s217
    %s235 = sphi 0, %s235
    %s237 = sphi 0, %s235
    %s238 = sphi 0, %s237
    %s252 = sphi 0, %s238
    %s256 = sphi 0, %s256
    %s258 = sphi 0, %s256
    %s259 = sphi 0, %s258
    %s273 = sphi 0, %s259
    %s277 = sphi 0, %s277
    %s279 = sphi 0, %s277
    %s280 = sphi 0, %s279
    %s294 = sphi 0, %s280
    %s298 = sphi 0, %s298
    %s300 = sphi 0, %s298
    %s301 = sphi 0, %s300
    %s315 = sphi 0, %s301
    %s319 = sphi 0, %s319
    %s321 = sphi 0, %s319
    %s322 = sphi 0, %s321
    %s336 = sphi 0, %s322
    %s342 = sphi 0, %s344
    %s345 = sphi 0, %s342
    %s346 = sphi 0, %s345
    %s362 = sphi 0, %s346
    %s368 = sphi 0, %s370
    %s371 = sphi 0, %s368
    %s372 = sphi 0, %s371
    %s388 = sphi 0, %s372
    %s394 = sphi 0, %s396
    %s397 = sphi 0, %s394
    %s398 = sphi 0, %s397
    %s414 = sphi 0, %s398
  $region4: #{tpu_custom_call.1} parent=0 // loop_header_branch
    %26 = sbr.rel (%p24) target = $region8
  $region5: #{tpu_custom_call.1} parent=0 // loop_body
    %s28 = ssub.s32 %s23, 1
    %s29 = ssub.s32 %s23, 2
    %s30 = sadd.s32 %s23, 1
    %s31 = ssub.s32 %s23, %s30
    %p32 = scmp.eq.s32.totalorder %s31, 0
    %s34 = sadd.s32 %s33, 1
    %s35 = scalar_select %p32, %s33, %s34
    %p38 = pneg %p32
    %p39 = scmp.eq.s32.totalorder %s23, 3
    %p40 = por %p38, %p39
    %p41 = scmp.ne.s32.totalorder %s33, %s36
    %p42 = scmp.eq.s32.totalorder %s23, 0
    %p43 = por %p41, %p42
    %p44 = scmp.ne.s32.totalorder %s33, %s36
    %p45 = scmp.eq.s32.totalorder %s28, 3
    %p46 = por %p44, %p45
    %p47 = scmp.ne.s32.totalorder %s36, %s37
    %p48 = scmp.eq.s32.totalorder %s28, 0
    %p49 = por %p47, %p48
    %p50 = scmp.ne.s32.totalorder %s36, %s37
    %p51 = scmp.eq.s32.totalorder %s29, 3
    %p52 = por %p50, %p51
    %p54 = scmp.ne.s32.totalorder %s37, %s53
    %p55 = scmp.eq.s32.totalorder %s29, 0
    %p56 = por %p54, %p55
    %s57 = ssub.s32 %s23, %s30
    %p58 = scmp.eq.s32.totalorder %s57, 0
    %s60 = sadd.s32 %s59, 1
    %s61 = scalar_select %p58, %s59, %s60
    %p64 = pneg %p58
    %p65 = scmp.eq.s32.totalorder %s23, 3
    %p66 = por %p64, %p65
    %p67 = scmp.ne.s32.totalorder %s59, %s62
    %p68 = scmp.eq.s32.totalorder %s23, 0
    %p69 = por %p67, %p68
    %p70 = scmp.ne.s32.totalorder %s59, %s62
    %p71 = scmp.eq.s32.totalorder %s28, 3
    %p72 = por %p70, %p71
    %p73 = scmp.ne.s32.totalorder %s62, %s63
    %p74 = scmp.eq.s32.totalorder %s28, 0
    %p75 = por %p73, %p74
    %p76 = scmp.ne.s32.totalorder %s62, %s63
    %p77 = scmp.eq.s32.totalorder %s29, 3
    %p78 = por %p76, %p77
    %p80 = scmp.ne.s32.totalorder %s63, %s79
    %p81 = scmp.eq.s32.totalorder %s29, 0
    %p82 = por %p80, %p81
    %s83 = ssub.s32 %s23, %s30
    %p84 = scmp.eq.s32.totalorder %s83, 0
    %s86 = sadd.s32 %s85, 1
    %s87 = scalar_select %p84, %s85, %s86
    %p90 = pneg %p84
    %p91 = scmp.eq.s32.totalorder %s23, 3
    %p92 = por %p90, %p91
    %p93 = scmp.ne.s32.totalorder %s85, %s88
    %p94 = scmp.eq.s32.totalorder %s23, 0
    %p95 = por %p93, %p94
    %p96 = scmp.ne.s32.totalorder %s85, %s88
    %p97 = scmp.eq.s32.totalorder %s28, 3
    %p98 = por %p96, %p97
    %p99 = scmp.ne.s32.totalorder %s88, %s89
    %p100 = scmp.eq.s32.totalorder %s28, 0
    %p101 = por %p99, %p100
    %p102 = scmp.ne.s32.totalorder %s88, %s89
    %p103 = scmp.eq.s32.totalorder %s29, 3
    %p104 = por %p102, %p103
    %p106 = scmp.ne.s32.totalorder %s89, %s105
    %p107 = scmp.eq.s32.totalorder %s29, 0
    %p108 = por %p106, %p107
    %s110 = sadd.s32 %s109, 1
    %p113 = scmp.eq.s32.totalorder %s23, 3
    %p114 = scmp.ne.s32.totalorder %s109, %s111
    %p115 = scmp.eq.s32.totalorder %s23, 0
    %p116 = por %p114, %p115
    %p117 = scmp.ne.s32.totalorder %s109, %s111
    %p118 = scmp.eq.s32.totalorder %s28, 3
    %p119 = por %p117, %p118
    %p120 = scmp.ne.s32.totalorder %s111, %s112
    %p121 = scmp.eq.s32.totalorder %s28, 0
    %p122 = por %p120, %p121
    %p123 = scmp.ne.s32.totalorder %s111, %s112
    %p124 = scmp.eq.s32.totalorder %s29, 3
    %p125 = por %p123, %p124
    %p127 = scmp.ne.s32.totalorder %s112, %s126
    %p128 = scmp.eq.s32.totalorder %s29, 0
    %p129 = por %p127, %p128
    %s131 = sadd.s32 %s130, 1
    %p134 = scmp.eq.s32.totalorder %s23, 3
    %p135 = scmp.ne.s32.totalorder %s130, %s132
    %p136 = scmp.eq.s32.totalorder %s23, 0
    %p137 = por %p135, %p136
    %p138 = scmp.ne.s32.totalorder %s130, %s132
    %p139 = scmp.eq.s32.totalorder %s28, 3
    %p140 = por %p138, %p139
    %p141 = scmp.ne.s32.totalorder %s132, %s133
    %p142 = scmp.eq.s32.totalorder %s28, 0
    %p143 = por %p141, %p142
    %p144 = scmp.ne.s32.totalorder %s132, %s133
    %p145 = scmp.eq.s32.totalorder %s29, 3
    %p146 = por %p144, %p145
    %p148 = scmp.ne.s32.totalorder %s133, %s147
    %p149 = scmp.eq.s32.totalorder %s29, 0
    %p150 = por %p148, %p149
    %s152 = sadd.s32 %s151, 1
    %p155 = scmp.eq.s32.totalorder %s23, 3
    %p156 = scmp.ne.s32.totalorder %s151, %s153
    %p157 = scmp.eq.s32.totalorder %s23, 0
    %p158 = por %p156, %p157
    %p159 = scmp.ne.s32.totalorder %s151, %s153
    %p160 = scmp.eq.s32.totalorder %s28, 3
    %p161 = por %p159, %p160
    %p162 = scmp.ne.s32.totalorder %s153, %s154
    %p163 = scmp.eq.s32.totalorder %s28, 0
    %p164 = por %p162, %p163
    %p165 = scmp.ne.s32.totalorder %s153, %s154
    %p166 = scmp.eq.s32.totalorder %s29, 3
    %p167 = por %p165, %p166
    %p169 = scmp.ne.s32.totalorder %s154, %s168
    %p170 = scmp.eq.s32.totalorder %s29, 0
    %p171 = por %p169, %p170
    %s173 = sadd.s32 %s172, 1
    %p176 = scmp.eq.s32.totalorder %s23, 3
    %p177 = scmp.ne.s32.totalorder %s172, %s174
    %p178 = scmp.eq.s32.totalorder %s23, 0
    %p179 = por %p177, %p178
    %p180 = scmp.ne.s32.totalorder %s172, %s174
    %p181 = scmp.eq.s32.totalorder %s28, 3
    %p182 = por %p180, %p181
    %p183 = scmp.ne.s32.totalorder %s174, %s175
    %p184 = scmp.eq.s32.totalorder %s28, 0
    %p185 = por %p183, %p184
    %p186 = scmp.ne.s32.totalorder %s174, %s175
    %p187 = scmp.eq.s32.totalorder %s29, 3
    %p188 = por %p186, %p187
    %p190 = scmp.ne.s32.totalorder %s175, %s189
    %p191 = scmp.eq.s32.totalorder %s29, 0
    %p192 = por %p190, %p191
    %s194 = sadd.s32 %s193, 1
    %p197 = scmp.eq.s32.totalorder %s23, 3
    %p198 = scmp.ne.s32.totalorder %s193, %s195
    %p199 = scmp.eq.s32.totalorder %s23, 0
    %p200 = por %p198, %p199
    %p201 = scmp.ne.s32.totalorder %s193, %s195
    %p202 = scmp.eq.s32.totalorder %s28, 3
    %p203 = por %p201, %p202
    %p204 = scmp.ne.s32.totalorder %s195, %s196
    %p205 = scmp.eq.s32.totalorder %s28, 0
    %p206 = por %p204, %p205
    %p207 = scmp.ne.s32.totalorder %s195, %s196
    %p208 = scmp.eq.s32.totalorder %s29, 3
    %p209 = por %p207, %p208
    %p211 = scmp.ne.s32.totalorder %s196, %s210
    %p212 = scmp.eq.s32.totalorder %s29, 0
    %p213 = por %p211, %p212
    %s215 = sadd.s32 %s214, 1
    %p218 = scmp.eq.s32.totalorder %s23, 3
    %p219 = scmp.ne.s32.totalorder %s214, %s216
    %p220 = scmp.eq.s32.totalorder %s23, 0
    %p221 = por %p219, %p220
    %p222 = scmp.ne.s32.totalorder %s214, %s216
    %p223 = scmp.eq.s32.totalorder %s28, 3
    %p224 = por %p222, %p223
    %p225 = scmp.ne.s32.totalorder %s216, %s217
    %p226 = scmp.eq.s32.totalorder %s28, 0
    %p227 = por %p225, %p226
    %p228 = scmp.ne.s32.totalorder %s216, %s217
    %p229 = scmp.eq.s32.totalorder %s29, 3
    %p230 = por %p228, %p229
    %p232 = scmp.ne.s32.totalorder %s217, %s231
    %p233 = scmp.eq.s32.totalorder %s29, 0
    %p234 = por %p232, %p233
    %s236 = sadd.s32 %s235, 1
    %p239 = scmp.eq.s32.totalorder %s23, 3
    %p240 = scmp.ne.s32.totalorder %s235, %s237
    %p241 = scmp.eq.s32.totalorder %s23, 0
    %p242 = por %p240, %p241
    %p243 = scmp.ne.s32.totalorder %s235, %s237
    %p244 = scmp.eq.s32.totalorder %s28, 3
    %p245 = por %p243, %p244
    %p246 = scmp.ne.s32.totalorder %s237, %s238
    %p247 = scmp.eq.s32.totalorder %s28, 0
    %p248 = por %p246, %p247
    %p249 = scmp.ne.s32.totalorder %s237, %s238
    %p250 = scmp.eq.s32.totalorder %s29, 3
    %p251 = por %p249, %p250
    %p253 = scmp.ne.s32.totalorder %s238, %s252
    %p254 = scmp.eq.s32.totalorder %s29, 0
    %p255 = por %p253, %p254
    %s257 = sadd.s32 %s256, 1
    %p260 = scmp.eq.s32.totalorder %s23, 3
    %p261 = scmp.ne.s32.totalorder %s256, %s258
    %p262 = scmp.eq.s32.totalorder %s23, 0
    %p263 = por %p261, %p262
    %p264 = scmp.ne.s32.totalorder %s256, %s258
    %p265 = scmp.eq.s32.totalorder %s28, 3
    %p266 = por %p264, %p265
    %p267 = scmp.ne.s32.totalorder %s258, %s259
    %p268 = scmp.eq.s32.totalorder %s28, 0
    %p269 = por %p267, %p268
    %p270 = scmp.ne.s32.totalorder %s258, %s259
    %p271 = scmp.eq.s32.totalorder %s29, 3
    %p272 = por %p270, %p271
    %p274 = scmp.ne.s32.totalorder %s259, %s273
    %p275 = scmp.eq.s32.totalorder %s29, 0
    %p276 = por %p274, %p275
    %s278 = sadd.s32 %s277, 1
    %p281 = scmp.eq.s32.totalorder %s23, 3
    %p282 = scmp.ne.s32.totalorder %s277, %s279
    %p283 = scmp.eq.s32.totalorder %s23, 0
    %p284 = por %p282, %p283
    %p285 = scmp.ne.s32.totalorder %s277, %s279
    %p286 = scmp.eq.s32.totalorder %s28, 3
    %p287 = por %p285, %p286
    %p288 = scmp.ne.s32.totalorder %s279, %s280
    %p289 = scmp.eq.s32.totalorder %s28, 0
    %p290 = por %p288, %p289
    %p291 = scmp.ne.s32.totalorder %s279, %s280
    %p292 = scmp.eq.s32.totalorder %s29, 3
    %p293 = por %p291, %p292
    %p295 = scmp.ne.s32.totalorder %s280, %s294
    %p296 = scmp.eq.s32.totalorder %s29, 0
    %p297 = por %p295, %p296
    %s299 = sadd.s32 %s298, 1
    %p302 = scmp.eq.s32.totalorder %s23, 3
    %p303 = scmp.ne.s32.totalorder %s298, %s300
    %p304 = scmp.eq.s32.totalorder %s23, 0
    %p305 = por %p303, %p304
    %p306 = scmp.ne.s32.totalorder %s298, %s300
    %p307 = scmp.eq.s32.totalorder %s28, 3
    %p308 = por %p306, %p307
    %p309 = scmp.ne.s32.totalorder %s300, %s301
    %p310 = scmp.eq.s32.totalorder %s28, 0
    %p311 = por %p309, %p310
    %p312 = scmp.ne.s32.totalorder %s300, %s301
    %p313 = scmp.eq.s32.totalorder %s29, 3
    %p314 = por %p312, %p313
    %p316 = scmp.ne.s32.totalorder %s301, %s315
    %p317 = scmp.eq.s32.totalorder %s29, 0
    %p318 = por %p316, %p317
    %s320 = sadd.s32 %s319, 1
    %p323 = scmp.eq.s32.totalorder %s23, 3
    %p324 = scmp.ne.s32.totalorder %s319, %s321
    %p325 = scmp.eq.s32.totalorder %s23, 0
    %p326 = por %p324, %p325
    %p327 = scmp.ne.s32.totalorder %s319, %s321
    %p328 = scmp.eq.s32.totalorder %s28, 3
    %p329 = por %p327, %p328
    %p330 = scmp.ne.s32.totalorder %s321, %s322
    %p331 = scmp.eq.s32.totalorder %s28, 0
    %p332 = por %p330, %p331
    %p333 = scmp.ne.s32.totalorder %s321, %s322
    %p334 = scmp.eq.s32.totalorder %s29, 3
    %p335 = por %p333, %p334
    %p337 = scmp.ne.s32.totalorder %s322, %s336
    %p338 = scmp.eq.s32.totalorder %s29, 0
    %p339 = por %p337, %p338
    %s340 = ssub.s32 %s23, %s30
    %p341 = scmp.eq.s32.totalorder %s340, 0
    %s343 = sadd.s32 %s342, 1
    %s344 = scalar_select %p341, %s342, %s343
    %p347 = pneg %p341
    %p348 = scmp.eq.s32.totalorder %s23, 3
    %p349 = por %p347, %p348
    %p350 = scmp.ne.s32.totalorder %s342, %s345
    %p351 = scmp.eq.s32.totalorder %s23, 0
    %p352 = por %p350, %p351
    %p353 = scmp.ne.s32.totalorder %s342, %s345
    %p354 = scmp.eq.s32.totalorder %s28, 3
    %p355 = por %p353, %p354
    %p356 = scmp.ne.s32.totalorder %s345, %s346
    %p357 = scmp.eq.s32.totalorder %s28, 0
    %p358 = por %p356, %p357
    %p359 = scmp.ne.s32.totalorder %s345, %s346
    %p360 = scmp.eq.s32.totalorder %s29, 3
    %p361 = por %p359, %p360
    %p363 = scmp.ne.s32.totalorder %s346, %s362
    %p364 = scmp.eq.s32.totalorder %s29, 0
    %p365 = por %p363, %p364
    %s366 = ssub.s32 %s23, %s30
    %p367 = scmp.eq.s32.totalorder %s366, 0
    %s369 = sadd.s32 %s368, 1
    %s370 = scalar_select %p367, %s368, %s369
    %p373 = pneg %p367
    %p374 = scmp.eq.s32.totalorder %s23, 3
    %p375 = por %p373, %p374
    %p376 = scmp.ne.s32.totalorder %s368, %s371
    %p377 = scmp.eq.s32.totalorder %s23, 0
    %p378 = por %p376, %p377
    %p379 = scmp.ne.s32.totalorder %s368, %s371
    %p380 = scmp.eq.s32.totalorder %s28, 3
    %p381 = por %p379, %p380
    %p382 = scmp.ne.s32.totalorder %s371, %s372
    %p383 = scmp.eq.s32.totalorder %s28, 0
    %p384 = por %p382, %p383
    %p385 = scmp.ne.s32.totalorder %s371, %s372
    %p386 = scmp.eq.s32.totalorder %s29, 3
    %p387 = por %p385, %p386
    %p389 = scmp.ne.s32.totalorder %s372, %s388
    %p390 = scmp.eq.s32.totalorder %s29, 0
    %p391 = por %p389, %p390
    %s392 = ssub.s32 %s23, %s30
    %p393 = scmp.eq.s32.totalorder %s392, 0
    %s395 = sadd.s32 %s394, 1
    %s396 = scalar_select %p393, %s394, %s395
    %p399 = pneg %p393
    %p400 = scmp.eq.s32.totalorder %s23, 3
    %p401 = por %p399, %p400
    %p402 = scmp.ne.s32.totalorder %s394, %s397
    %p403 = scmp.eq.s32.totalorder %s23, 0
    %p404 = por %p402, %p403
    %p405 = scmp.ne.s32.totalorder %s394, %s397
    %p406 = scmp.eq.s32.totalorder %s28, 3
    %p407 = por %p405, %p406
    %p408 = scmp.ne.s32.totalorder %s397, %s398
    %p409 = scmp.eq.s32.totalorder %s28, 0
    %p410 = por %p408, %p409
    %p411 = scmp.ne.s32.totalorder %s397, %s398
    %p412 = scmp.eq.s32.totalorder %s29, 3
    %p413 = por %p411, %p412
    %p415 = scmp.ne.s32.totalorder %s398, %s414
    %p416 = scmp.eq.s32.totalorder %s29, 0
    %p417 = por %p415, %p416
    %p418 = scmp.le.s32.totalorder 1, %s23
    %p419 = scmp.lt.s32.totalorder %s23, 5
    %p420 = pnand %p418, %p419
    %p421 = pneg %p420
    // Predicated region
    $region9: #{tpu_custom_call.1} parent=5 // pred_check
      _
    $region10: #{tpu_custom_call.1} parent=5 // pred_check_branch
      %423 = sbr.rel (%p420) target = $region12
    $region11: #{tpu_custom_call.1} parent=5 // pred_region
      %s424 = ssub.s32 %s23, 1
      // Predicated region
      $region13: #{tpu_custom_call.1} parent=11 // pred_check
        %p425 = pneg %p122
      $region14: #{tpu_custom_call.1} parent=11 // pred_check_branch
        %427 = sbr.rel (%p425) target = $region16
      $region15: #{tpu_custom_call.1} parent=11 // pred_region
        _
      $region16: #{tpu_custom_call.1} parent=11 // pred_fallthru
        _
      // Predicated region
      $region17: #{tpu_custom_call.1} parent=11 // pred_check
        %p428 = pneg %p143
      $region18: #{tpu_custom_call.1} parent=11 // pred_check_branch
        %430 = sbr.rel (%p428) target = $region20
      $region19: #{tpu_custom_call.1} parent=11 // pred_region
        _
      $region20: #{tpu_custom_call.1} parent=11 // pred_fallthru
        _
      // Predicated region
      $region21: #{tpu_custom_call.1} parent=11 // pred_check
        %p431 = pneg %p164
      $region22: #{tpu_custom_call.1} parent=11 // pred_check_branch
        %433 = sbr.rel (%p431) target = $region24
      $region23: #{tpu_custom_call.1} parent=11 // pred_region
        _
      $region24: #{tpu_custom_call.1} parent=11 // pred_fallthru
        _
      // Predicated region
      $region25: #{tpu_custom_call.1} parent=11 // pred_check
        %p434 = pneg %p185
      $region26: #{tpu_custom_call.1} parent=11 // pred_check_branch
        %436 = sbr.rel (%p434) target = $region28
      $region27: #{tpu_custom_call.1} parent=11 // pred_region
        _
      $region28: #{tpu_custom_call.1} parent=11 // pred_fallthru
        _
      // Predicated region
      $region29: #{tpu_custom_call.1} parent=11 // pred_check
        %p437 = pneg %p206
      $region30: #{tpu_custom_call.1} parent=11 // pred_check_branch
        %439 = sbr.rel (%p437) target = $region32
      $region31: #{tpu_custom_call.1} parent=11 // pred_region
        _
      $region32: #{tpu_custom_call.1} parent=11 // pred_fallthru
        _
      // Predicated region
      $region33: #{tpu_custom_call.1} parent=11 // pred_check
        %p440 = pneg %p227
      $region34: #{tpu_custom_call.1} parent=11 // pred_check_branch
        %442 = sbr.rel (%p440) target = $region36
      $region35: #{tpu_custom_call.1} parent=11 // pred_region
        _
      $region36: #{tpu_custom_call.1} parent=11 // pred_fallthru
        _
      // Predicated region
      $region37: #{tpu_custom_call.1} parent=11 // pred_check
        %p443 = pneg %p248
      $region38: #{tpu_custom_call.1} parent=11 // pred_check_branch
        %445 = sbr.rel (%p443) target = $region40
      $region39: #{tpu_custom_call.1} parent=11 // pred_region
        _
      $region40: #{tpu_custom_call.1} parent=11 // pred_fallthru
        _
      // Predicated region
      $region41: #{tpu_custom_call.1} parent=11 // pred_check
        %p446 = pneg %p269
      $region42: #{tpu_custom_call.1} parent=11 // pred_check_branch
        %448 = sbr.rel (%p446) target = $region44
      $region43: #{tpu_custom_call.1} parent=11 // pred_region
        _
      $region44: #{tpu_custom_call.1} parent=11 // pred_fallthru
        _
      // Predicated region
      $region45: #{tpu_custom_call.1} parent=11 // pred_check
        %p449 = pneg %p290
      $region46: #{tpu_custom_call.1} parent=11 // pred_check_branch
        %451 = sbr.rel (%p449) target = $region48
      $region47: #{tpu_custom_call.1} parent=11 // pred_region
        _
      $region48: #{tpu_custom_call.1} parent=11 // pred_fallthru
        _
      // Predicated region
      $region49: #{tpu_custom_call.1} parent=11 // pred_check
        %p452 = pneg %p311
      $region50: #{tpu_custom_call.1} parent=11 // pred_check_branch
        %454 = sbr.rel (%p452) target = $region52
      $region51: #{tpu_custom_call.1} parent=11 // pred_region
        _
      $region52: #{tpu_custom_call.1} parent=11 // pred_fallthru
        _
      // Predicated region
      $region53: #{tpu_custom_call.1} parent=11 // pred_check
        %p455 = pneg %p332
      $region54: #{tpu_custom_call.1} parent=11 // pred_check_branch
        %457 = sbr.rel (%p455) target = $region56
      $region55: #{tpu_custom_call.1} parent=11 // pred_region
        _
      $region56: #{tpu_custom_call.1} parent=11 // pred_fallthru
        _
    $region12: #{tpu_custom_call.1} parent=5 // pred_fallthru
      _
    %p458 = scmp.lt.s32.totalorder %s23, 4
    // Predicated region
    $region57: #{tpu_custom_call.1} parent=5 // pred_check
      %p459 = pneg %p458
    $region58: #{tpu_custom_call.1} parent=5 // pred_check_branch
      %461 = sbr.rel (%p459) target = $region60
    $region59: #{tpu_custom_call.1} parent=5 // pred_region
      // Predicated region
      $region61: #{tpu_custom_call.1} parent=59 // pred_check
        %p462 = pneg %p43
      $region62: #{tpu_custom_call.1} parent=59 // pred_check_branch
        %464 = sbr.rel (%p462) target = $region64
      $region63: #{tpu_custom_call.1} parent=59 // pred_region
        %s465 = smul.u32 2, %s23
        %p466 = scmp.lt.s32.totalorder %s465, 7
        %s467 = scalar_select %p466, %s465, 7
        %s468 = smul.addr %s467, 8
        %s469 = scalar_lea.vmem %s0, %s468
        %s470 = smul.u32 2, %s23
      $region64: #{tpu_custom_call.1} parent=59 // pred_fallthru
        _
      // Predicated region
      $region65: #{tpu_custom_call.1} parent=59 // pred_check
        %p471 = pneg %p69
      $region66: #{tpu_custom_call.1} parent=59 // pred_check_branch
        %473 = sbr.rel (%p471) target = $region68
      $region67: #{tpu_custom_call.1} parent=59 // pred_region
        %s474 = smul.u32 16, %s23
        %p475 = scmp.lt.s32.totalorder %s474, 63
        %s476 = scalar_select %p475, %s474, 63
        %s477 = smul.addr %s476, 8
        %s478 = scalar_lea.vmem %s1, %s477
        %s479 = smul.u32 16, %s23
      $region68: #{tpu_custom_call.1} parent=59 // pred_fallthru
        _
      // Predicated region
      $region69: #{tpu_custom_call.1} parent=59 // pred_check
        %p480 = pneg %p95
      $region70: #{tpu_custom_call.1} parent=59 // pred_check_branch
        %482 = sbr.rel (%p480) target = $region72
      $region71: #{tpu_custom_call.1} parent=59 // pred_region
        %s483 = smul.u32 16, %s23
        %p484 = scmp.lt.s32.totalorder %s483, 63
        %s485 = scalar_select %p484, %s483, 63
        %s486 = smul.addr %s485, 4
        %s487 = scalar_lea.vmem %s2, %s486
        %s488 = smul.u32 16, %s23
      $region72: #{tpu_custom_call.1} parent=59 // pred_fallthru
        _
    $region60: #{tpu_custom_call.1} parent=5 // pred_fallthru
      _
    %p489 = scmp.le.s32.totalorder 1, %s23
    %p490 = scmp.lt.s32.totalorder %s23, 5
    %p491 = pnand %p489, %p490
    %p492 = pneg %p491
    // Predicated region
    $region73: #{tpu_custom_call.1} parent=5 // pred_check
      _
    $region74: #{tpu_custom_call.1} parent=5 // pred_check_branch
      %494 = sbr.rel (%p491) target = $region76
    $region75: #{tpu_custom_call.1} parent=5 // pred_region
      %s495 = ssub.s32 %s23, 1
      %s496 = smul.u32 2, %s28
      %p497 = scmp.lt.s32.totalorder %s496, 7
      %s498 = scalar_select %p497, %s496, 7
      %s499 = smul.addr %s498, 8
      %s500 = scalar_lea.vmem %s0, %s499
      %p501 = pneg %p49
      %p502 = pneg %p46
      %s503 = smul.u32 16, %s28
      %p504 = scmp.lt.s32.totalorder %s503, 63
      %s505 = scalar_select %p504, %s503, 63
      %s506 = smul.addr %s505, 8
      %s507 = scalar_lea.vmem %s1, %s506
      %p508 = pneg %p75
      %p509 = pneg %p72
      %s510 = smul.u32 16, %s28
      %p511 = scmp.lt.s32.totalorder %s510, 63
      %s512 = scalar_select %p511, %s510, 63
      %s513 = smul.addr %s512, 4
      %s514 = scalar_lea.vmem %s2, %s513
      %p515 = pneg %p101
      %p516 = pneg %p98
      %p517 = pneg %p122
      %p518 = pneg %p119
      %p519 = pneg %p143
      %p520 = pneg %p140
      %p521 = pneg %p164
      %p522 = pneg %p161
      %p523 = pneg %p185
      %p524 = pneg %p182
      %p525 = pneg %p206
      %p526 = pneg %p203
      %p527 = pneg %p227
      %p528 = pneg %p224
      %p529 = pneg %p248
      %p530 = pneg %p245
      %p531 = pneg %p269
      %p532 = pneg %p266
      %p533 = pneg %p290
      %p534 = pneg %p287
      %p535 = pneg %p311
      %p536 = pneg %p308
      %p537 = pneg %p332
      %p538 = pneg %p329
      %p539 = pneg %p358
      %p540 = pneg %p355
      %s541 = smul.u32 2, %s28
      %p542 = scmp.lt.s32.totalorder %s541, 7
      %s543 = scalar_select %p542, %s541, 7
      %s544 = smul.addr %s543, 8
      %s545 = scalar_lea.vmem %s14, %s544
      %p546 = pneg %p384
      %p547 = pneg %p381
      %s548 = smul.u32 2, %s28
      %p549 = scmp.lt.s32.totalorder %s548, 7
      %s550 = scalar_select %p549, %s548, 7
      %s551 = smul.addr %s550, 8
      %s552 = scalar_lea.vmem %s15, %s551
      %p553 = pneg %p410
      %p554 = pneg %p407
      %s555 = smul.u32 2, %s28
      %p556 = scmp.lt.s32.totalorder %s555, 7
      %s557 = scalar_select %p556, %s555, 7
      %s558 = smul.addr %s557, 4
      %s559 = scalar_lea.vmem %s16, %s558
      %s560 = smul.u32 2, %s28
      %p561 = scmp.lt.s32.totalorder %s560, 7
      %s562 = scalar_select %p561, %s560, 7
      %s563 = smul.addr %s562, 8
      %s564 = scalar_lea.vmem %s0, %s563
      %s565 = smul.u32 2, %s28
      %s566 = smul.u32 16, %s28
      %p567 = scmp.lt.s32.totalorder %s566, 63
      %s568 = scalar_select %p567, %s566, 63
      %s569 = smul.addr %s568, 8
      %s570 = scalar_lea.vmem %s1, %s569
      %s571 = smul.u32 16, %s28
      %s572 = smul.u32 16, %s28
      %p573 = scmp.lt.s32.totalorder %s572, 63
      %s574 = scalar_select %p573, %s572, 63
      %s575 = smul.addr %s574, 4
      %s576 = scalar_lea.vmem %s2, %s575
      %s577 = smul.u32 16, %s28
      %s578 = smul.u32 2, %s28
      %p579 = scmp.lt.s32.totalorder %s578, 7
      %s580 = scalar_select %p579, %s578, 7
      %s581 = smul.addr %s580, 8
      %s582 = scalar_lea.vmem %s14, %s581
      %s583 = smul.u32 2, %s28
      %s584 = smul.u32 2, %s28
      %p585 = scmp.lt.s32.totalorder %s584, 7
      %s586 = scalar_select %p585, %s584, 7
      %s587 = smul.addr %s586, 8
      %s588 = scalar_lea.vmem %s15, %s587
      %s589 = smul.u32 2, %s28
      %s590 = smul.u32 2, %s28
      %p591 = scmp.lt.s32.totalorder %s590, 7
      %s592 = scalar_select %p591, %s590, 7
      %s593 = smul.addr %s592, 4
      %s594 = scalar_lea.vmem %s16, %s593
      %s595 = smul.u32 2, %s28
      %v597 = vld [vmem:[%s570] sm:$0xff]
      %v598 = vld [vmem:[%s570 + $0x8] sm:$0xff]
      %v599 = vld [vmem:[%s570 + $0x10] sm:$0xff]
      %v600 = vld [vmem:[%s570 + $0x18] sm:$0xff]
      %v601 = vld [vmem:[%s570 + $0x20] sm:$0xff]
      %v602 = vld [vmem:[%s570 + $0x28] sm:$0xff]
      %v603 = vld [vmem:[%s570 + $0x30] sm:$0xff]
      %v604 = vld [vmem:[%s570 + $0x38] sm:$0xff]
      %v605 = vld [vmem:[%s570 + $0x40] sm:$0xff]
      %v606 = vld [vmem:[%s570 + $0x48] sm:$0xff]
      %v607 = vld [vmem:[%s570 + $0x50] sm:$0xff]
      %v608 = vld [vmem:[%s570 + $0x58] sm:$0xff]
      %v609 = vld [vmem:[%s570 + $0x60] sm:$0xff]
      %v610 = vld [vmem:[%s570 + $0x68] sm:$0xff]
      %v611 = vld [vmem:[%s570 + $0x70] sm:$0xff]
      %v612 = vld [vmem:[%s570 + $0x78] sm:$0xff]
      %v613 = vld [vmem:[%s564] sm:$0xff]
      %v614 = vld [vmem:[%s564 + $0x8] sm:$0xff]
      %v617 = vcombine.high %v613, %v613
      %v619 = vunpack.c.l.s4 1966171168
      %v620 = vunpack.c.0.s8 %v619
      %v621 = vlaneseq
      %v622 = vshrl.u32 %v621, 7
      %v623 = vsub.s32 %v620, %v622
      %v624 = vrot.slane %v613, %v623
      %v626 = vunpack.c.l.s4 1966171168
      %v627 = vunpack.c.0.s8 %v626
      %v628 = vlaneseq
      %v629 = vshrl.u32 %v628, 7
      %v630 = vsub.s32 %v627, %v629
      %v631 = vrot.slane %v617, %v630
      %v632 = vcombine.high %v624, %v624
      %v633 = vcombine.high %v631, %v631
      %v635 = vunpack.c.l.s4 1966171168
      %v636 = vunpack.c.0.s8 %v635
      %v637 = vlaneseq
      %v638 = vshrl.u32 %v637, 7
      %v639 = vsub.s32 %v636, %v638
      %v640 = vrot.slane %v624, %v639
      %v642 = vunpack.c.l.s4 1966171168
      %v643 = vunpack.c.0.s8 %v642
      %v644 = vlaneseq
      %v645 = vshrl.u32 %v644, 7
      %v646 = vsub.s32 %v643, %v645
      %v647 = vrot.slane %v631, %v646
      %v649 = vunpack.c.l.s4 1966171168
      %v650 = vunpack.c.0.s8 %v649
      %v651 = vlaneseq
      %v652 = vshrl.u32 %v651, 7
      %v653 = vsub.s32 %v650, %v652
      %v654 = vrot.slane %v632, %v653
      %v656 = vunpack.c.l.s4 1966171168
      %v657 = vunpack.c.0.s8 %v656
      %v658 = vlaneseq
      %v659 = vshrl.u32 %v658, 7
      %v660 = vsub.s32 %v657, %v659
      %v661 = vrot.slane %v633, %v660
      %v662 = vcombine.high %v640, %v640
      %v663 = vcombine.high %v647, %v647
      %v664 = vcombine.high %v654, %v654
      %v665 = vcombine.high %v661, %v661
      %v666 = vcombine.high %v614, %v614
      %v668 = vunpack.c.l.s4 1966171168
      %v669 = vunpack.c.0.s8 %v668
      %v670 = vlaneseq
      %v671 = vshrl.u32 %v670, 7
      %v672 = vsub.s32 %v669, %v671
      %v673 = vrot.slane %v614, %v672
      %v675 = vunpack.c.l.s4 1966171168
      %v676 = vunpack.c.0.s8 %v675
      %v677 = vlaneseq
      %v678 = vshrl.u32 %v677, 7
      %v679 = vsub.s32 %v676, %v678
      %v680 = vrot.slane %v666, %v679
      %v681 = vcombine.high %v673, %v673
      %v682 = vcombine.high %v680, %v680
      %v684 = vunpack.c.l.s4 1966171168
      %v685 = vunpack.c.0.s8 %v684
      %v686 = vlaneseq
      %v687 = vshrl.u32 %v686, 7
      %v688 = vsub.s32 %v685, %v687
      %v689 = vrot.slane %v673, %v688
      %v691 = vunpack.c.l.s4 1966171168
      %v692 = vunpack.c.0.s8 %v691
      %v693 = vlaneseq
      %v694 = vshrl.u32 %v693, 7
      %v695 = vsub.s32 %v692, %v694
      %v696 = vrot.slane %v680, %v695
      %v698 = vunpack.c.l.s4 1966171168
      %v699 = vunpack.c.0.s8 %v698
      %v700 = vlaneseq
      %v701 = vshrl.u32 %v700, 7
      %v702 = vsub.s32 %v699, %v701
      %v703 = vrot.slane %v681, %v702
      %v705 = vunpack.c.l.s4 1966171168
      %v706 = vunpack.c.0.s8 %v705
      %v707 = vlaneseq
      %v708 = vshrl.u32 %v707, 7
      %v709 = vsub.s32 %v706, %v708
      %v710 = vrot.slane %v682, %v709
      %v711 = vcombine.high %v689, %v689
      %v712 = vcombine.high %v696, %v696
      %v713 = vcombine.high %v703, %v703
      %v714 = vcombine.high %v710, %v710
      %v715 = vlaneseq
      %v716 = vshrl.u32 %v715, 7
      %v717 = vsub.s32 0, %v716
      %v718 = vrot.slane %v640, %v717
      %v719 = vlaneseq
      %v720 = vshrl.u32 %v719, 7
      %v721 = vsub.s32 0, %v720
      %v722 = vrot.slane %v654, %v721
      %v723 = vlaneseq
      %v724 = vshrl.u32 %v723, 7
      %v725 = vsub.s32 0, %v724
      %v726 = vrot.slane %v662, %v725
      %v727 = vlaneseq
      %v728 = vshrl.u32 %v727, 7
      %v729 = vsub.s32 0, %v728
      %v730 = vrot.slane %v664, %v729
      %v731 = vlaneseq
      %v732 = vshrl.u32 %v731, 7
      %v733 = vsub.s32 0, %v732
      %v734 = vrot.slane %v647, %v733
      %v735 = vlaneseq
      %v736 = vshrl.u32 %v735, 7
      %v737 = vsub.s32 0, %v736
      %v738 = vrot.slane %v661, %v737
      %v739 = vlaneseq
      %v740 = vshrl.u32 %v739, 7
      %v741 = vsub.s32 0, %v740
      %v742 = vrot.slane %v663, %v741
      %v743 = vlaneseq
      %v744 = vshrl.u32 %v743, 7
      %v745 = vsub.s32 0, %v744
      %v746 = vrot.slane %v665, %v745
      %v747 = vlaneseq
      %v748 = vshrl.u32 %v747, 7
      %v749 = vsub.s32 0, %v748
      %v750 = vrot.slane %v689, %v749
      %v751 = vlaneseq
      %v752 = vshrl.u32 %v751, 7
      %v753 = vsub.s32 0, %v752
      %v754 = vrot.slane %v703, %v753
      %v755 = vlaneseq
      %v756 = vshrl.u32 %v755, 7
      %v757 = vsub.s32 0, %v756
      %v758 = vrot.slane %v711, %v757
      %v759 = vlaneseq
      %v760 = vshrl.u32 %v759, 7
      %v761 = vsub.s32 0, %v760
      %v762 = vrot.slane %v713, %v761
      %v763 = vlaneseq
      %v764 = vshrl.u32 %v763, 7
      %v765 = vsub.s32 0, %v764
      %v766 = vrot.slane %v696, %v765
      %v767 = vlaneseq
      %v768 = vshrl.u32 %v767, 7
      %v769 = vsub.s32 0, %v768
      %v770 = vrot.slane %v710, %v769
      %v771 = vlaneseq
      %v772 = vshrl.u32 %v771, 7
      %v773 = vsub.s32 0, %v772
      %v774 = vrot.slane %v712, %v773
      %v775 = vlaneseq
      %v776 = vshrl.u32 %v775, 7
      %v777 = vsub.s32 0, %v776
      %v778 = vrot.slane %v714, %v777
      %v795 = vsub.f32 %v597, %v718
      %v796 = vsub.f32 %v598, %v722
      %v797 = vsub.f32 %v599, %v726
      %v798 = vsub.f32 %v600, %v730
      %v799 = vsub.f32 %v601, %v734
      %v800 = vsub.f32 %v602, %v738
      %v801 = vsub.f32 %v603, %v742
      %v802 = vsub.f32 %v604, %v746
      %v803 = vsub.f32 %v605, %v750
      %v804 = vsub.f32 %v606, %v754
      %v805 = vsub.f32 %v607, %v758
      %v806 = vsub.f32 %v608, %v762
      %v807 = vsub.f32 %v609, %v766
      %v808 = vsub.f32 %v610, %v770
      %v809 = vsub.f32 %v611, %v774
      %v810 = vsub.f32 %v612, %v778
      %v811 = vld [vmem:[%s3] sm:$0x3]
      %v812 = vpack.c.bf16 %v796, %v795
      %v813 = vpack.c.bf16 %v798, %v797
      %v814 = vpack.c.bf16 %v800, %v799
      %v815 = vpack.c.bf16 %v802, %v801
      %v816 = vpack.c.bf16 %v804, %v803
      %v817 = vpack.c.bf16 %v806, %v805
      %v818 = vpack.c.bf16 %v808, %v807
      %v819 = vpack.c.bf16 %v810, %v809
      %v820 = vld [vmem:[%s576] sm:$0xf]
      %v821 = vld [vmem:[%s576 + $0x4] sm:$0xf]
      %v822 = vld [vmem:[%s576 + $0x8] sm:$0xf]
      %v823 = vld [vmem:[%s576 + $0xc] sm:$0xf]
      %v824 = vld [vmem:[%s576 + $0x10] sm:$0xf]
      %v825 = vld [vmem:[%s576 + $0x14] sm:$0xf]
      %v826 = vld [vmem:[%s576 + $0x18] sm:$0xf]
      %v827 = vld [vmem:[%s576 + $0x1c] sm:$0xf]
      %v828 = vld [vmem:[%s576 + $0x20] sm:$0xf]
      %v829 = vld [vmem:[%s576 + $0x24] sm:$0xf]
      %v830 = vld [vmem:[%s576 + $0x28] sm:$0xf]
      %v831 = vld [vmem:[%s576 + $0x2c] sm:$0xf]
      %v832 = vld [vmem:[%s576 + $0x30] sm:$0xf]
      %v833 = vld [vmem:[%s576 + $0x34] sm:$0xf]
      %v834 = vld [vmem:[%s576 + $0x38] sm:$0xf]
      %v835 = vld [vmem:[%s576 + $0x3c] sm:$0xf]
      %v836 = vld [vmem:[%s4] sm:$0x3]
      %v853 = vunpack.c.l.b16 %v820
      %v854 = vunpack.c.l.b16 %v821
      %v855 = vunpack.c.l.b16 %v822
      %v856 = vunpack.c.l.b16 %v823
      %v857 = vunpack.c.l.b16 %v824
      %v858 = vunpack.c.l.b16 %v825
      %v859 = vunpack.c.l.b16 %v826
      %v860 = vunpack.c.l.b16 %v827
      %v861 = vunpack.c.l.b16 %v828
      %v862 = vunpack.c.l.b16 %v829
      %v863 = vunpack.c.l.b16 %v830
      %v864 = vunpack.c.l.b16 %v831
      %v865 = vunpack.c.l.b16 %v832
      %v866 = vunpack.c.l.b16 %v833
      %v867 = vunpack.c.l.b16 %v834
      %v868 = vunpack.c.l.b16 %v835
      %v869 = vpack.c.b16 %v854, %v853
      %v870 = vpack.c.b16 %v856, %v855
      %v871 = vpack.c.b16 %v858, %v857
      %v872 = vpack.c.b16 %v860, %v859
      %v873 = vpack.c.b16 %v862, %v861
      %v874 = vpack.c.b16 %v864, %v863
      %v875 = vpack.c.b16 %v866, %v865
      %v876 = vpack.c.b16 %v868, %v867
      %vm877 = vcmask 31744
      %v879 = vsel %vm877, %v869, 0
      %v882 = vsel %vm877, %v870, 0
      %v885 = vsel %vm877, %v871, 0
      %v888 = vsel %vm877, %v872, 0
      %v891 = vsel %vm877, %v873, 0
      %v894 = vsel %vm877, %v874, 0
      %v897 = vsel %vm877, %v875, 0
      %v900 = vsel %vm877, %v876, 0
      %vm902 = vcmask 1041408
      %v904 = vsel %vm902, %v836, 0
      %906 = vmatprep.subr.bf16.mxu0 0
      %907 = vmatpush1.bf16.msra.mxu0 %v904
      %908 = vmatprep.subr.bf16.mxu0 0
      %909 = vmatpush1.bf16.msra.mxu0 0
      %910 = vmatprep.subr.bf16.mxu0 0
      %911 = vmatpush1.bf16.msra.mxu0 0
      %912 = vmatprep.subr.bf16.mxu0 0
      %913 = vmatpush1.bf16.msra.mxu0 0
      %914 = vmatprep.subr.bf16.mxu0 0
      %915 = vmatpush1.bf16.msra.mxu0 0
      %916 = vmatprep.subr.bf16.mxu0 0
      %917 = vmatpush1.bf16.msra.mxu0 0
      %918 = vmatprep.subr.bf16.mxu0 0
      %919 = vmatpush1.bf16.msra.mxu0 0
      %920 = vmatprep.subr.bf16.mxu0 0
      %921 = vmatpush1.bf16.msra.mxu0 0
      %922 = vmatprep.subr.bf16.mxu0 0
      %923 = vmatpush1.bf16.msra.mxu0 0
      %924 = vmatprep.subr.bf16.mxu0 0
      %925 = vmatpush1.bf16.msra.mxu0 0
      %926 = vmatprep.subr.bf16.mxu0 0
      %927 = vmatpush1.bf16.msra.mxu0 0
      %928 = vmatprep.subr.bf16.mxu0 0
      %929 = vmatpush1.bf16.msra.mxu0 0
      %930 = vmatprep.subr.bf16.mxu0 0
      %931 = vmatpush1.bf16.msra.mxu0 0
      %932 = vmatprep.subr.bf16.mxu0 0
      %933 = vmatpush1.bf16.msra.mxu0 0
      %934 = vmatprep.subr.bf16.mxu0 0
      %935 = vmatpush1.bf16.msra.mxu0 0
      %936 = vmatprep.subr.bf16.mxu0 0
      %937 = vmatpush1.bf16.msra.mxu0 0
      %938 = vmatprep.mubr.bf16.mxu0 0
      %939 = vmatmul.mubr.bf16.gmra.mrb[0].mxu0 %v879
      %v940 = vpop.f32.mrb[0].mxu0
      %v941 = vadd.f32 0.0, %v940
      %v942 = vpop.f32.mrb[0].mxu0
      %v943 = vpop.f32.mrb[0].mxu0
      %v944 = vadd.f32 0.0, %v943
      %v945 = vpop.f32.mrb[0].mxu0
      %946 = vmatprep.mubr.bf16.mxu0 0
      %947 = vmatmul.mubr.bf16.gmra.mrb[0].mxu0 %v882
      %v948 = vpop.f32.mrb[0].mxu0
      %v949 = vadd.f32 0.0, %v948
      %v950 = vpop.f32.mrb[0].mxu0
      %v951 = vpop.f32.mrb[0].mxu0
      %v952 = vadd.f32 0.0, %v951
      %v953 = vpop.f32.mrb[0].mxu0
      %954 = vmatprep.mubr.bf16.mxu0 0
      %955 = vmatmul.mubr.bf16.gmra.mrb[0].mxu0 %v885
      %v956 = vpop.f32.mrb[0].mxu0
      %v957 = vadd.f32 0.0, %v956
      %v958 = vpop.f32.mrb[0].mxu0
      %v959 = vpop.f32.mrb[0].mxu0
      %v960 = vadd.f32 0.0, %v959
      %v961 = vpop.f32.mrb[0].mxu0
      %962 = vmatprep.mubr.bf16.mxu0 0
      %963 = vmatmul.mubr.bf16.gmra.mrb[0].mxu0 %v888
      %v964 = vpop.f32.mrb[0].mxu0
      %v965 = vadd.f32 0.0, %v964
      %v966 = vpop.f32.mrb[0].mxu0
      %v967 = vpop.f32.mrb[0].mxu0
      %v968 = vadd.f32 0.0, %v967
      %v969 = vpop.f32.mrb[0].mxu0
      %970 = vmatprep.mubr.bf16.mxu0 0
      %971 = vmatmul.mubr.bf16.gmra.mrb[0].mxu0 %v891
      %v972 = vpop.f32.mrb[0].mxu0
      %v973 = vadd.f32 0.0, %v972
      %v974 = vpop.f32.mrb[0].mxu0
      %v975 = vpop.f32.mrb[0].mxu0
      %v976 = vadd.f32 0.0, %v975
      %v977 = vpop.f32.mrb[0].mxu0
      %978 = vmatprep.mubr.bf16.mxu0 0
      %979 = vmatmul.mubr.bf16.gmra.mrb[0].mxu0 %v894
      %v980 = vpop.f32.mrb[0].mxu0
      %v981 = vadd.f32 0.0, %v980
      %v982 = vpop.f32.mrb[0].mxu0
      %v983 = vpop.f32.mrb[0].mxu0
      %v984 = vadd.f32 0.0, %v983
      %v985 = vpop.f32.mrb[0].mxu0
      %986 = vmatprep.mubr.bf16.mxu0 0
      %987 = vmatmul.mubr.bf16.gmra.mrb[0].mxu0 %v897
      %v988 = vpop.f32.mrb[0].mxu0
      %v989 = vadd.f32 0.0, %v988
      %v990 = vpop.f32.mrb[0].mxu0
      %v991 = vpop.f32.mrb[0].mxu0
      %v992 = vadd.f32 0.0, %v991
      %v993 = vpop.f32.mrb[0].mxu0
      %994 = vmatprep.mubr.bf16.mxu0 0
      %995 = vmatmul.mubr.bf16.gmra.mrb[0].mxu0 %v900
      %v996 = vpop.f32.mrb[0].mxu0
      %v997 = vadd.f32 0.0, %v996
      %v998 = vpop.f32.mrb[0].mxu0
      %v999 = vpop.f32.mrb[0].mxu0
      %v1000 = vadd.f32 0.0, %v999
      %v1001 = vpop.f32.mrb[0].mxu0
      %1002 = vdwg.mxu0
      %vm1003 = vcmask 23552
      %v1005 = vsel %vm1003, %v812, 0
      %v1008 = vsel %vm1003, %v813, 0
      %v1011 = vsel %vm1003, %v814, 0
      %v1014 = vsel %vm1003, %v815, 0
      %v1017 = vsel %vm1003, %v816, 0
      %v1020 = vsel %vm1003, %v817, 0
      %v1023 = vsel %vm1003, %v818, 0
      %v1026 = vsel %vm1003, %v819, 0
      %vm1028 = vcmask 1040384
      %v1029 = vsel %vm1028, 4294967295, 65535
      %v1030 = vsel %vm902, %v1029, 0
      %v1032 = vand.u32 %v811, %v1030
      %1034 = vmatprep.subr.bf16.mxu0 0
      %1035 = vmatpush1.bf16.msra.mxu0 %v1032
      %1036 = vmatprep.subr.bf16.mxu0 0
      %1037 = vmatpush1.bf16.msra.mxu0 0
      %1038 = vmatprep.subr.bf16.mxu0 0
      %1039 = vmatpush1.bf16.msra.mxu0 0
      %1040 = vmatprep.subr.bf16.mxu0 0
      %1041 = vmatpush1.bf16.msra.mxu0 0
      %1042 = vmatprep.subr.bf16.mxu0 0
      %1043 = vmatpush1.bf16.msra.mxu0 0
      %1044 = vmatprep.subr.bf16.mxu0 0
      %1045 = vmatpush1.bf16.msra.mxu0 0
      %1046 = vmatprep.subr.bf16.mxu0 0
      %1047 = vmatpush1.bf16.msra.mxu0 0
      %1048 = vmatprep.subr.bf16.mxu0 0
      %1049 = vmatpush1.bf16.msra.mxu0 0
      %1050 = vmatprep.subr.bf16.mxu0 0
      %1051 = vmatpush1.bf16.msra.mxu0 0
      %1052 = vmatprep.subr.bf16.mxu0 0
      %1053 = vmatpush1.bf16.msra.mxu0 0
      %1054 = vmatprep.subr.bf16.mxu0 0
      %1055 = vmatpush1.bf16.msra.mxu0 0
      %1056 = vmatprep.subr.bf16.mxu0 0
      %1057 = vmatpush1.bf16.msra.mxu0 0
      %1058 = vmatprep.subr.bf16.mxu0 0
      %1059 = vmatpush1.bf16.msra.mxu0 0
      %1060 = vmatprep.subr.bf16.mxu0 0
      %1061 = vmatpush1.bf16.msra.mxu0 0
      %1062 = vmatprep.subr.bf16.mxu0 0
      %1063 = vmatpush1.bf16.msra.mxu0 0
      %1064 = vmatprep.subr.bf16.mxu0 0
      %1065 = vmatpush1.bf16.msra.mxu0 0
      %1066 = vmatprep.mubr.bf16.mxu0 0
      %1067 = vmatmul.mubr.bf16.gmra.mrb[0].mxu0 %v1005
      %v1068 = vpop.f32.mrb[0].mxu0
      %v1069 = vadd.f32 %v941, %v1068
      %v1070 = vpop.f32.mrb[0].mxu0
      %v1071 = vpop.f32.mrb[0].mxu0
      %v1072 = vadd.f32 %v944, %v1071
      %v1073 = vpop.f32.mrb[0].mxu0
      %1074 = vmatprep.mubr.bf16.mxu0 0
      %1075 = vmatmul.mubr.bf16.gmra.mrb[0].mxu0 %v1008
      %v1076 = vpop.f32.mrb[0].mxu0
      %v1077 = vadd.f32 %v949, %v1076
      %v1078 = vpop.f32.mrb[0].mxu0
      %v1079 = vpop.f32.mrb[0].mxu0
      %v1080 = vadd.f32 %v952, %v1079
      %v1081 = vpop.f32.mrb[0].mxu0
      %1082 = vmatprep.mubr.bf16.mxu0 0
      %1083 = vmatmul.mubr.bf16.gmra.mrb[0].mxu0 %v1011
      %v1084 = vpop.f32.mrb[0].mxu0
      %v1085 = vadd.f32 %v957, %v1084
      %v1086 = vpop.f32.mrb[0].mxu0
      %v1087 = vpop.f32.mrb[0].mxu0
      %v1088 = vadd.f32 %v960, %v1087
      %v1089 = vpop.f32.mrb[0].mxu0
      %1090 = vmatprep.mubr.bf16.mxu0 0
      %1091 = vmatmul.mubr.bf16.gmra.mrb[0].mxu0 %v1014
      %v1092 = vpop.f32.mrb[0].mxu0
      %v1093 = vadd.f32 %v965, %v1092
      %v1094 = vpop.f32.mrb[0].mxu0
      %v1095 = vpop.f32.mrb[0].mxu0
      %v1096 = vadd.f32 %v968, %v1095
      %v1097 = vpop.f32.mrb[0].mxu0
      %1098 = vmatprep.mubr.bf16.mxu0 0
      %1099 = vmatmul.mubr.bf16.gmra.mrb[0].mxu0 %v1017
      %v1100 = vpop.f32.mrb[0].mxu0
      %v1101 = vadd.f32 %v973, %v1100
      %v1102 = vpop.f32.mrb[0].mxu0
      %v1103 = vpop.f32.mrb[0].mxu0
      %v1104 = vadd.f32 %v976, %v1103
      %v1105 = vpop.f32.mrb[0].mxu0
      %1106 = vmatprep.mubr.bf16.mxu0 0
      %1107 = vmatmul.mubr.bf16.gmra.mrb[0].mxu0 %v1020
      %v1108 = vpop.f32.mrb[0].mxu0
      %v1109 = vadd.f32 %v981, %v1108
      %v1110 = vpop.f32.mrb[0].mxu0
      %v1111 = vpop.f32.mrb[0].mxu0
      %v1112 = vadd.f32 %v984, %v1111
      %v1113 = vpop.f32.mrb[0].mxu0
      %1114 = vmatprep.mubr.bf16.mxu0 0
      %1115 = vmatmul.mubr.bf16.gmra.mrb[0].mxu0 %v1023
      %v1116 = vpop.f32.mrb[0].mxu0
      %v1117 = vadd.f32 %v989, %v1116
      %v1118 = vpop.f32.mrb[0].mxu0
      %v1119 = vpop.f32.mrb[0].mxu0
      %v1120 = vadd.f32 %v992, %v1119
      %v1121 = vpop.f32.mrb[0].mxu0
      %1122 = vmatprep.mubr.bf16.mxu0 0
      %1123 = vmatmul.mubr.bf16.gmra.mrb[0].mxu0 %v1026
      %v1124 = vpop.f32.mrb[0].mxu0
      %v1125 = vadd.f32 %v997, %v1124
      %v1126 = vpop.f32.mrb[0].mxu0
      %v1127 = vpop.f32.mrb[0].mxu0
      %v1128 = vadd.f32 %v1000, %v1127
      %v1129 = vpop.f32.mrb[0].mxu0
      %1130 = vdwg.mxu0
      %v1131 = vmul.f32 %v1069, 0.5
      %v1132 = vmul.f32 %v1072, 0.5
      %v1133 = vmul.f32 %v1077, 0.5
      %v1134 = vmul.f32 %v1080, 0.5
      %v1135 = vmul.f32 %v1085, 0.5
      %v1136 = vmul.f32 %v1088, 0.5
      %v1137 = vmul.f32 %v1093, 0.5
      %v1138 = vmul.f32 %v1096, 0.5
      %v1139 = vmul.f32 %v1101, 0.5
      %v1140 = vmul.f32 %v1104, 0.5
      %v1141 = vmul.f32 %v1109, 0.5
      %v1142 = vmul.f32 %v1112, 0.5
      %v1143 = vmul.f32 %v1117, 0.5
      %v1144 = vmul.f32 %v1120, 0.5
      %v1145 = vmul.f32 %v1125, 0.5
      %v1146 = vmul.f32 %v1128, 0.5
      %v1147 = vmul.f32 %v1069, 0.044715
      %v1148 = vmul.f32 %v1072, 0.044715
      %v1149 = vmul.f32 %v1077, 0.044715
      %v1150 = vmul.f32 %v1080, 0.044715
      %v1151 = vmul.f32 %v1085, 0.044715
      %v1152 = vmul.f32 %v1088, 0.044715
      %v1153 = vmul.f32 %v1093, 0.044715
      %v1154 = vmul.f32 %v1096, 0.044715
      %v1155 = vmul.f32 %v1101, 0.044715
      %v1156 = vmul.f32 %v1104, 0.044715
      %v1157 = vmul.f32 %v1109, 0.044715
      %v1158 = vmul.f32 %v1112, 0.044715
      %v1159 = vmul.f32 %v1117, 0.044715
      %v1160 = vmul.f32 %v1120, 0.044715
      %v1161 = vmul.f32 %v1125, 0.044715
      %v1162 = vmul.f32 %v1128, 0.044715
      %v1163 = vmul.f32 %v1147, %v1069
      %v1164 = vmul.f32 %v1148, %v1072
      %v1165 = vmul.f32 %v1149, %v1077
      %v1166 = vmul.f32 %v1150, %v1080
      %v1167 = vmul.f32 %v1151, %v1085
      %v1168 = vmul.f32 %v1152, %v1088
      %v1169 = vmul.f32 %v1153, %v1093
      %v1170 = vmul.f32 %v1154, %v1096
      %v1171 = vmul.f32 %v1155, %v1101
      %v1172 = vmul.f32 %v1156, %v1104
      %v1173 = vmul.f32 %v1157, %v1109
      %v1174 = vmul.f32 %v1158, %v1112
      %v1175 = vmul.f32 %v1159, %v1117
      %v1176 = vmul.f32 %v1160, %v1120
      %v1177 = vmul.f32 %v1161, %v1125
      %v1178 = vmul.f32 %v1162, %v1128
      %v1179 = vmul.f32 %v1163, %v1069
      %v1180 = vmul.f32 %v1164, %v1072
      %v1181 = vmul.f32 %v1165, %v1077
      %v1182 = vmul.f32 %v1166, %v1080
      %v1183 = vmul.f32 %v1167, %v1085
      %v1184 = vmul.f32 %v1168, %v1088
      %v1185 = vmul.f32 %v1169, %v1093
      %v1186 = vmul.f32 %v1170, %v1096
      %v1187 = vmul.f32 %v1171, %v1101
      %v1188 = vmul.f32 %v1172, %v1104
      %v1189 = vmul.f32 %v1173, %v1109
      %v1190 = vmul.f32 %v1174, %v1112
      %v1191 = vmul.f32 %v1175, %v1117
      %v1192 = vmul.f32 %v1176, %v1120
      %v1193 = vmul.f32 %v1177, %v1125
      %v1194 = vmul.f32 %v1178, %v1128
      %v1195 = vadd.f32 %v1069, %v1179
      %v1196 = vadd.f32 %v1072, %v1180
      %v1197 = vadd.f32 %v1077, %v1181
      %v1198 = vadd.f32 %v1080, %v1182
      %v1199 = vadd.f32 %v1085, %v1183
      %v1200 = vadd.f32 %v1088, %v1184
      %v1201 = vadd.f32 %v1093, %v1185
      %v1202 = vadd.f32 %v1096, %v1186
      %v1203 = vadd.f32 %v1101, %v1187
      %v1204 = vadd.f32 %v1104, %v1188
      %v1205 = vadd.f32 %v1109, %v1189
      %v1206 = vadd.f32 %v1112, %v1190
      %v1207 = vadd.f32 %v1117, %v1191
      %v1208 = vadd.f32 %v1120, %v1192
      %v1209 = vadd.f32 %v1125, %v1193
      %v1210 = vadd.f32 %v1128, %v1194
      %v1211 = vmul.f32 %v1195, 0.7978846
      %v1212 = vmul.f32 %v1196, 0.7978846
      %v1213 = vmul.f32 %v1197, 0.7978846
      %v1214 = vmul.f32 %v1198, 0.7978846
      %v1215 = vmul.f32 %v1199, 0.7978846
      %v1216 = vmul.f32 %v1200, 0.7978846
      %v1217 = vmul.f32 %v1201, 0.7978846
      %v1218 = vmul.f32 %v1202, 0.7978846
      %v1219 = vmul.f32 %v1203, 0.7978846
      %v1220 = vmul.f32 %v1204, 0.7978846
      %v1221 = vmul.f32 %v1205, 0.7978846
      %v1222 = vmul.f32 %v1206, 0.7978846
      %v1223 = vmul.f32 %v1207, 0.7978846
      %v1224 = vmul.f32 %v1208, 0.7978846
      %v1225 = vmul.f32 %v1209, 0.7978846
      %v1226 = vmul.f32 %v1210, 0.7978846
      %v1227 = vtanh.pop %v1211
      %v1228 = vtanh.pop %v1212
      %v1229 = vtanh.pop %v1213
      %v1230 = vtanh.pop %v1214
      %v1231 = vtanh.pop %v1215
      %v1232 = vtanh.pop %v1216
      %v1233 = vtanh.pop %v1217
      %v1234 = vtanh.pop %v1218
      %v1235 = vtanh.pop %v1219
      %v1236 = vtanh.pop %v1220
      %v1237 = vtanh.pop %v1221
      %v1238 = vtanh.pop %v1222
      %v1239 = vtanh.pop %v1223
      %v1240 = vtanh.pop %v1224
      %v1241 = vtanh.pop %v1225
      %v1242 = vtanh.pop %v1226
      %v1243 = vadd.f32 %v1227, 1.0
      %v1244 = vadd.f32 %v1228, 1.0
      %v1245 = vadd.f32 %v1229, 1.0
      %v1246 = vadd.f32 %v1230, 1.0
      %v1247 = vadd.f32 %v1231, 1.0
      %v1248 = vadd.f32 %v1232, 1.0
      %v1249 = vadd.f32 %v1233, 1.0
      %v1250 = vadd.f32 %v1234, 1.0
      %v1251 = vadd.f32 %v1235, 1.0
      %v1252 = vadd.f32 %v1236, 1.0
      %v1253 = vadd.f32 %v1237, 1.0
      %v1254 = vadd.f32 %v1238, 1.0
      %v1255 = vadd.f32 %v1239, 1.0
      %v1256 = vadd.f32 %v1240, 1.0
      %v1257 = vadd.f32 %v1241, 1.0
      %v1258 = vadd.f32 %v1242, 1.0
      %v1259 = vmul.f32 %v1131, %v1243
      %v1260 = vmul.f32 %v1132, %v1244
      %v1261 = vmul.f32 %v1133, %v1245
      %v1262 = vmul.f32 %v1134, %v1246
      %v1263 = vmul.f32 %v1135, %v1247
      %v1264 = vmul.f32 %v1136, %v1248
      %v1265 = vmul.f32 %v1137, %v1249
      %v1266 = vmul.f32 %v1138, %v1250
      %v1267 = vmul.f32 %v1139, %v1251
      %v1268 = vmul.f32 %v1140, %v1252
      %v1269 = vmul.f32 %v1141, %v1253
      %v1270 = vmul.f32 %v1142, %v1254
      %v1271 = vmul.f32 %v1143, %v1255
      %v1272 = vmul.f32 %v1144, %v1256
      %v1273 = vmul.f32 %v1145, %v1257
      %v1274 = vmul.f32 %v1146, %v1258
      %v1275 = vld [vmem:[%s5] sm:$0xf]
      %v1276 = vld [vmem:[%s5 + $0x4] sm:$0x3]
      %v1277 = vpack.c.bf16 %v1260, %v1259
      %v1278 = vpack.c.bf16 %v1262, %v1261
      %v1279 = vpack.c.bf16 %v1264, %v1263
      %v1280 = vpack.c.bf16 %v1266, %v1265
      %v1281 = vpack.c.bf16 %v1268, %v1267
      %v1282 = vpack.c.bf16 %v1270, %v1269
      %v1283 = vpack.c.bf16 %v1272, %v1271
      %v1284 = vpack.c.bf16 %v1274, %v1273
      %v1287 = vunpack.c.l.b16 %v1275
      %v1288 = vunpack.c.l.b16 %v1276
      %v1289 = vpack.c.b16 %v1288, %v1287
      %vm1290 = vcmask 97280
      %v1292 = vsel %vm1290, %v1277, 0
      %v1295 = vsel %vm1290, %v1278, 0
      %v1298 = vsel %vm1290, %v1279, 0
      %v1301 = vsel %vm1290, %v1280, 0
      %v1304 = vsel %vm1290, %v1281, 0
      %v1307 = vsel %vm1290, %v1282, 0
      %v1310 = vsel %vm1290, %v1283, 0
      %v1313 = vsel %vm1290, %v1284, 0
      %vm1315 = vcmask 1045504
      %v1317 = vsel %vm1315, %v1289, 0
      %1319 = vmatprep.subr.bf16.mxu0 0
      %1320 = vmatpush1.bf16.msra.mxu0 %v1317
      %1321 = vmatprep.subr.bf16.mxu0 0
      %1322 = vmatpush1.bf16.msra.mxu0 0
      %1323 = vmatprep.subr.bf16.mxu0 0
      %1324 = vmatpush1.bf16.msra.mxu0 0
      %1325 = vmatprep.subr.bf16.mxu0 0
      %1326 = vmatpush1.bf16.msra.mxu0 0
      %1327 = vmatprep.subr.bf16.mxu0 0
      %1328 = vmatpush1.bf16.msra.mxu0 0
      %1329 = vmatprep.subr.bf16.mxu0 0
      %1330 = vmatpush1.bf16.msra.mxu0 0
      %1331 = vmatprep.subr.bf16.mxu0 0
      %1332 = vmatpush1.bf16.msra.mxu0 0
      %1333 = vmatprep.subr.bf16.mxu0 0
      %1334 = vmatpush1.bf16.msra.mxu0 0
      %1335 = vmatprep.subr.bf16.mxu0 0
      %1336 = vmatpush1.bf16.msra.mxu0 0
      %1337 = vmatprep.subr.bf16.mxu0 0
      %1338 = vmatpush1.bf16.msra.mxu0 0
      %1339 = vmatprep.subr.bf16.mxu0 0
      %1340 = vmatpush1.bf16.msra.mxu0 0
      %1341 = vmatprep.subr.bf16.mxu0 0
      %1342 = vmatpush1.bf16.msra.mxu0 0
      %1343 = vmatprep.subr.bf16.mxu0 0
      %1344 = vmatpush1.bf16.msra.mxu0 0
      %1345 = vmatprep.subr.bf16.mxu0 0
      %1346 = vmatpush1.bf16.msra.mxu0 0
      %1347 = vmatprep.subr.bf16.mxu0 0
      %1348 = vmatpush1.bf16.msra.mxu0 0
      %1349 = vmatprep.subr.bf16.mxu0 0
      %1350 = vmatpush1.bf16.msra.mxu0 0
      %1351 = vmatprep.mubr.bf16.mxu0 0
      %1352 = vmatmul.mubr.bf16.gmra.mrb[0].mxu0 %v1292
      %v1353 = vpop.f32.mrb[0].mxu0
      %v1354 = vadd.f32 0.0, %v1353
      %v1355 = vpop.f32.mrb[0].mxu0
      %v1356 = vpop.f32.mrb[0].mxu0
      %v1357 = vadd.f32 0.0, %v1356
      %v1358 = vpop.f32.mrb[0].mxu0
      %1359 = vmatprep.mubr.bf16.mxu0 0
      %1360 = vmatmul.mubr.bf16.gmra.mrb[0].mxu0 %v1295
      %v1361 = vpop.f32.mrb[0].mxu0
      %v1362 = vadd.f32 0.0, %v1361
      %v1363 = vpop.f32.mrb[0].mxu0
      %v1364 = vpop.f32.mrb[0].mxu0
      %v1365 = vadd.f32 0.0, %v1364
      %v1366 = vpop.f32.mrb[0].mxu0
      %1367 = vmatprep.mubr.bf16.mxu0 0
      %1368 = vmatmul.mubr.bf16.gmra.mrb[0].mxu0 %v1298
      %v1369 = vpop.f32.mrb[0].mxu0
      %v1370 = vadd.f32 0.0, %v1369
      %v1371 = vpop.f32.mrb[0].mxu0
      %v1372 = vpop.f32.mrb[0].mxu0
      %v1373 = vadd.f32 0.0, %v1372
      %v1374 = vpop.f32.mrb[0].mxu0
      %1375 = vmatprep.mubr.bf16.mxu0 0
      %1376 = vmatmul.mubr.bf16.gmra.mrb[0].mxu0 %v1301
      %v1377 = vpop.f32.mrb[0].mxu0
      %v1378 = vadd.f32 0.0, %v1377
      %v1379 = vpop.f32.mrb[0].mxu0
      %v1380 = vpop.f32.mrb[0].mxu0
      %v1381 = vadd.f32 0.0, %v1380
      %v1382 = vpop.f32.mrb[0].mxu0
      %1383 = vmatprep.mubr.bf16.mxu0 0
      %1384 = vmatmul.mubr.bf16.gmra.mrb[0].mxu0 %v1304
      %v1385 = vpop.f32.mrb[0].mxu0
      %v1386 = vadd.f32 0.0, %v1385
      %v1387 = vpop.f32.mrb[0].mxu0
      %v1388 = vpop.f32.mrb[0].mxu0
      %v1389 = vadd.f32 0.0, %v1388
      %v1390 = vpop.f32.mrb[0].mxu0
      %1391 = vmatprep.mubr.bf16.mxu0 0
      %1392 = vmatmul.mubr.bf16.gmra.mrb[0].mxu0 %v1307
      %v1393 = vpop.f32.mrb[0].mxu0
      %v1394 = vadd.f32 0.0, %v1393
      %v1395 = vpop.f32.mrb[0].mxu0
      %v1396 = vpop.f32.mrb[0].mxu0
      %v1397 = vadd.f32 0.0, %v1396
      %v1398 = vpop.f32.mrb[0].mxu0
      %1399 = vmatprep.mubr.bf16.mxu0 0
      %1400 = vmatmul.mubr.bf16.gmra.mrb[0].mxu0 %v1310
      %v1401 = vpop.f32.mrb[0].mxu0
      %v1402 = vadd.f32 0.0, %v1401
      %v1403 = vpop.f32.mrb[0].mxu0
      %v1404 = vpop.f32.mrb[0].mxu0
      %v1405 = vadd.f32 0.0, %v1404
      %v1406 = vpop.f32.mrb[0].mxu0
      %1407 = vmatprep.mubr.bf16.mxu0 0
      %1408 = vmatmul.mubr.bf16.gmra.mrb[0].mxu0 %v1313
      %v1409 = vpop.f32.mrb[0].mxu0
      %v1410 = vadd.f32 0.0, %v1409
      %v1411 = vpop.f32.mrb[0].mxu0
      %v1412 = vpop.f32.mrb[0].mxu0
      %v1413 = vadd.f32 0.0, %v1412
      %v1414 = vpop.f32.mrb[0].mxu0
      %1415 = vdwg.mxu0
      %v1416 = vmul.f32 %v1354, 0.5
      %v1417 = vmul.f32 %v1357, 0.5
      %v1418 = vmul.f32 %v1362, 0.5
      %v1419 = vmul.f32 %v1365, 0.5
      %v1420 = vmul.f32 %v1370, 0.5
      %v1421 = vmul.f32 %v1373, 0.5
      %v1422 = vmul.f32 %v1378, 0.5
      %v1423 = vmul.f32 %v1381, 0.5
      %v1424 = vmul.f32 %v1386, 0.5
      %v1425 = vmul.f32 %v1389, 0.5
      %v1426 = vmul.f32 %v1394, 0.5
      %v1427 = vmul.f32 %v1397, 0.5
      %v1428 = vmul.f32 %v1402, 0.5
      %v1429 = vmul.f32 %v1405, 0.5
      %v1430 = vmul.f32 %v1410, 0.5
      %v1431 = vmul.f32 %v1413, 0.5
      %v1432 = vmul.f32 %v1354, 0.044715
      %v1433 = vmul.f32 %v1357, 0.044715
      %v1434 = vmul.f32 %v1362, 0.044715
      %v1435 = vmul.f32 %v1365, 0.044715
      %v1436 = vmul.f32 %v1370, 0.044715
      %v1437 = vmul.f32 %v1373, 0.044715
      %v1438 = vmul.f32 %v1378, 0.044715
      %v1439 = vmul.f32 %v1381, 0.044715
      %v1440 = vmul.f32 %v1386, 0.044715
      %v1441 = vmul.f32 %v1389, 0.044715
      %v1442 = vmul.f32 %v1394, 0.044715
      %v1443 = vmul.f32 %v1397, 0.044715
      %v1444 = vmul.f32 %v1402, 0.044715
      %v1445 = vmul.f32 %v1405, 0.044715
      %v1446 = vmul.f32 %v1410, 0.044715
      %v1447 = vmul.f32 %v1413, 0.044715
      %v1448 = vmul.f32 %v1432, %v1354
      %v1449 = vmul.f32 %v1433, %v1357
      %v1450 = vmul.f32 %v1434, %v1362
      %v1451 = vmul.f32 %v1435, %v1365
      %v1452 = vmul.f32 %v1436, %v1370
      %v1453 = vmul.f32 %v1437, %v1373
      %v1454 = vmul.f32 %v1438, %v1378
      %v1455 = vmul.f32 %v1439, %v1381
      %v1456 = vmul.f32 %v1440, %v1386
      %v1457 = vmul.f32 %v1441, %v1389
      %v1458 = vmul.f32 %v1442, %v1394
      %v1459 = vmul.f32 %v1443, %v1397
      %v1460 = vmul.f32 %v1444, %v1402
      %v1461 = vmul.f32 %v1445, %v1405
      %v1462 = vmul.f32 %v1446, %v1410
      %v1463 = vmul.f32 %v1447, %v1413
      %v1464 = vmul.f32 %v1448, %v1354
      %v1465 = vmul.f32 %v1449, %v1357
      %v1466 = vmul.f32 %v1450, %v1362
      %v1467 = vmul.f32 %v1451, %v1365
      %v1468 = vmul.f32 %v1452, %v1370
      %v1469 = vmul.f32 %v1453, %v1373
      %v1470 = vmul.f32 %v1454, %v1378
      %v1471 = vmul.f32 %v1455, %v1381
      %v1472 = vmul.f32 %v1456, %v1386
      %v1473 = vmul.f32 %v1457, %v1389
      %v1474 = vmul.f32 %v1458, %v1394
      %v1475 = vmul.f32 %v1459, %v1397
      %v1476 = vmul.f32 %v1460, %v1402
      %v1477 = vmul.f32 %v1461, %v1405
      %v1478 = vmul.f32 %v1462, %v1410
      %v1479 = vmul.f32 %v1463, %v1413
      %v1480 = vadd.f32 %v1354, %v1464
      %v1481 = vadd.f32 %v1357, %v1465
      %v1482 = vadd.f32 %v1362, %v1466
      %v1483 = vadd.f32 %v1365, %v1467
      %v1484 = vadd.f32 %v1370, %v1468
      %v1485 = vadd.f32 %v1373, %v1469
      %v1486 = vadd.f32 %v1378, %v1470
      %v1487 = vadd.f32 %v1381, %v1471
      %v1488 = vadd.f32 %v1386, %v1472
      %v1489 = vadd.f32 %v1389, %v1473
      %v1490 = vadd.f32 %v1394, %v1474
      %v1491 = vadd.f32 %v1397, %v1475
      %v1492 = vadd.f32 %v1402, %v1476
      %v1493 = vadd.f32 %v1405, %v1477
      %v1494 = vadd.f32 %v1410, %v1478
      %v1495 = vadd.f32 %v1413, %v1479
      %v1496 = vmul.f32 %v1480, 0.7978846
      %v1497 = vmul.f32 %v1481, 0.7978846
      %v1498 = vmul.f32 %v1482, 0.7978846
      %v1499 = vmul.f32 %v1483, 0.7978846
      %v1500 = vmul.f32 %v1484, 0.7978846
      %v1501 = vmul.f32 %v1485, 0.7978846
      %v1502 = vmul.f32 %v1486, 0.7978846
      %v1503 = vmul.f32 %v1487, 0.7978846
      %v1504 = vmul.f32 %v1488, 0.7978846
      %v1505 = vmul.f32 %v1489, 0.7978846
      %v1506 = vmul.f32 %v1490, 0.7978846
      %v1507 = vmul.f32 %v1491, 0.7978846
      %v1508 = vmul.f32 %v1492, 0.7978846
      %v1509 = vmul.f32 %v1493, 0.7978846
      %v1510 = vmul.f32 %v1494, 0.7978846
      %v1511 = vmul.f32 %v1495, 0.7978846
      %v1512 = vtanh.pop %v1496
      %v1513 = vtanh.pop %v1497
      %v1514 = vtanh.pop %v1498
      %v1515 = vtanh.pop %v1499
      %v1516 = vtanh.pop %v1500
      %v1517 = vtanh.pop %v1501
      %v1518 = vtanh.pop %v1502
      %v1519 = vtanh.pop %v1503
      %v1520 = vtanh.pop %v1504
      %v1521 = vtanh.pop %v1505
      %v1522 = vtanh.pop %v1506
      %v1523 = vtanh.pop %v1507
      %v1524 = vtanh.pop %v1508
      %v1525 = vtanh.pop %v1509
      %v1526 = vtanh.pop %v1510
      %v1527 = vtanh.pop %v1511
      %v1528 = vadd.f32 %v1512, 1.0
      %v1529 = vadd.f32 %v1513, 1.0
      %v1530 = vadd.f32 %v1514, 1.0
      %v1531 = vadd.f32 %v1515, 1.0
      %v1532 = vadd.f32 %v1516, 1.0
      %v1533 = vadd.f32 %v1517, 1.0
      %v1534 = vadd.f32 %v1518, 1.0
      %v1535 = vadd.f32 %v1519, 1.0
      %v1536 = vadd.f32 %v1520, 1.0
      %v1537 = vadd.f32 %v1521, 1.0
      %v1538 = vadd.f32 %v1522, 1.0
      %v1539 = vadd.f32 %v1523, 1.0
      %v1540 = vadd.f32 %v1524, 1.0
      %v1541 = vadd.f32 %v1525, 1.0
      %v1542 = vadd.f32 %v1526, 1.0
      %v1543 = vadd.f32 %v1527, 1.0
      %v1544 = vmul.f32 %v1416, %v1528
      %v1545 = vmul.f32 %v1417, %v1529
      %v1546 = vmul.f32 %v1418, %v1530
      %v1547 = vmul.f32 %v1419, %v1531
      %v1548 = vmul.f32 %v1420, %v1532
      %v1549 = vmul.f32 %v1421, %v1533
      %v1550 = vmul.f32 %v1422, %v1534
      %v1551 = vmul.f32 %v1423, %v1535
      %v1552 = vmul.f32 %v1424, %v1536
      %v1553 = vmul.f32 %v1425, %v1537
      %v1554 = vmul.f32 %v1426, %v1538
      %v1555 = vmul.f32 %v1427, %v1539
      %v1556 = vmul.f32 %v1428, %v1540
      %v1557 = vmul.f32 %v1429, %v1541
      %v1558 = vmul.f32 %v1430, %v1542
      %v1559 = vmul.f32 %v1431, %v1543
      %v1560 = vld [vmem:[%s6] sm:$0xf]
      %v1561 = vld [vmem:[%s6 + $0x4] sm:$0xf]
      %v1562 = vld [vmem:[%s6 + $0x8] sm:$0xf]
      %v1563 = vpack.c.bf16 %v1545, %v1544
      %v1564 = vpack.c.bf16 %v1547, %v1546
      %v1565 = vpack.c.bf16 %v1549, %v1548
      %v1566 = vpack.c.bf16 %v1551, %v1550
      %v1567 = vpack.c.bf16 %v1553, %v1552
      %v1568 = vpack.c.bf16 %v1555, %v1554
      %v1569 = vpack.c.bf16 %v1557, %v1556
      %v1570 = vpack.c.bf16 %v1559, %v1558
      %v1574 = vunpack.c.l.b16 %v1560
      %v1575 = vunpack.c.l.b16 %v1561
      %v1576 = vunpack.c.l.b16 %v1562
      %v1577 = vpack.c.b16 %v1575, %v1574
      %v1578 = vpack.c.b16 %v1576, %v1576
      %vm1580 = vcmask 195584
      %v1582 = vsel %vm1580, %v1563, 0
      %v1585 = vsel %vm1580, %v1564, 0
      %v1588 = vsel %vm1580, %v1565, 0
      %v1591 = vsel %vm1580, %v1566, 0
      %v1594 = vsel %vm1580, %v1567, 0
      %v1597 = vsel %vm1580, %v1568, 0
      %v1600 = vsel %vm1580, %v1569, 0
      %v1603 = vsel %vm1580, %v1570, 0
      %vm1605 = vcmask 1043456
      %v1607 = vsel %vm1605, %v1578, 0
      %1609 = vmatprep.subr.bf16.mxu0 0
      %1610 = vmatpush1.bf16.msra.mxu0 %v1577
      %1611 = vmatprep.subr.bf16.mxu0 0
      %1612 = vmatpush1.bf16.msra.mxu0 %v1607
      %1613 = vmatprep.subr.bf16.mxu0 0
      %1614 = vmatpush1.bf16.msra.mxu0 0
      %1615 = vmatprep.subr.bf16.mxu0 0
      %1616 = vmatpush1.bf16.msra.mxu0 0
      %1617 = vmatprep.subr.bf16.mxu0 0
      %1618 = vmatpush1.bf16.msra.mxu0 0
      %1619 = vmatprep.subr.bf16.mxu0 0
      %1620 = vmatpush1.bf16.msra.mxu0 0
      %1621 = vmatprep.subr.bf16.mxu0 0
      %1622 = vmatpush1.bf16.msra.mxu0 0
      %1623 = vmatprep.subr.bf16.mxu0 0
      %1624 = vmatpush1.bf16.msra.mxu0 0
      %1625 = vmatprep.subr.bf16.mxu0 0
      %1626 = vmatpush1.bf16.msra.mxu0 0
      %1627 = vmatprep.subr.bf16.mxu0 0
      %1628 = vmatpush1.bf16.msra.mxu0 0
      %1629 = vmatprep.subr.bf16.mxu0 0
      %1630 = vmatpush1.bf16.msra.mxu0 0
      %1631 = vmatprep.subr.bf16.mxu0 0
      %1632 = vmatpush1.bf16.msra.mxu0 0
      %1633 = vmatprep.subr.bf16.mxu0 0
      %1634 = vmatpush1.bf16.msra.mxu0 0
      %1635 = vmatprep.subr.bf16.mxu0 0
      %1636 = vmatpush1.bf16.msra.mxu0 0
      %1637 = vmatprep.subr.bf16.mxu0 0
      %1638 = vmatpush1.bf16.msra.mxu0 0
      %1639 = vmatprep.subr.bf16.mxu0 0
      %1640 = vmatpush1.bf16.msra.mxu0 0
      %1641 = vmatprep.mubr.bf16.mxu0 0
      %1642 = vmatmul.mubr.bf16.gmra.mrb[0].mxu0 %v1582
      %v1643 = vpop.f32.mrb[0].mxu0
      %v1644 = vadd.f32 0.0, %v1643
      %v1645 = vpop.f32.mrb[0].mxu0
      %v1646 = vpop.f32.mrb[0].mxu0
      %v1647 = vadd.f32 0.0, %v1646
      %v1648 = vpop.f32.mrb[0].mxu0
      %1649 = vmatprep.mubr.bf16.mxu0 0
      %1650 = vmatmul.mubr.bf16.gmra.mrb[0].mxu0 %v1585
      %v1651 = vpop.f32.mrb[0].mxu0
      %v1652 = vadd.f32 0.0, %v1651
      %v1653 = vpop.f32.mrb[0].mxu0
      %v1654 = vpop.f32.mrb[0].mxu0
      %v1655 = vadd.f32 0.0, %v1654
      %v1656 = vpop.f32.mrb[0].mxu0
      %1657 = vmatprep.mubr.bf16.mxu0 0
      %1658 = vmatmul.mubr.bf16.gmra.mrb[0].mxu0 %v1588
      %v1659 = vpop.f32.mrb[0].mxu0
      %v1660 = vadd.f32 0.0, %v1659
      %v1661 = vpop.f32.mrb[0].mxu0
      %v1662 = vpop.f32.mrb[0].mxu0
      %v1663 = vadd.f32 0.0, %v1662
      %v1664 = vpop.f32.mrb[0].mxu0
      %1665 = vmatprep.mubr.bf16.mxu0 0
      %1666 = vmatmul.mubr.bf16.gmra.mrb[0].mxu0 %v1591
      %v1667 = vpop.f32.mrb[0].mxu0
      %v1668 = vadd.f32 0.0, %v1667
      %v1669 = vpop.f32.mrb[0].mxu0
      %v1670 = vpop.f32.mrb[0].mxu0
      %v1671 = vadd.f32 0.0, %v1670
      %v1672 = vpop.f32.mrb[0].mxu0
      %1673 = vmatprep.mubr.bf16.mxu0 0
      %1674 = vmatmul.mubr.bf16.gmra.mrb[0].mxu0 %v1594
      %v1675 = vpop.f32.mrb[0].mxu0
      %v1676 = vadd.f32 0.0, %v1675
      %v1677 = vpop.f32.mrb[0].mxu0
      %v1678 = vpop.f32.mrb[0].mxu0
      %v1679 = vadd.f32 0.0, %v1678
      %v1680 = vpop.f32.mrb[0].mxu0
      %1681 = vmatprep.mubr.bf16.mxu0 0
      %1682 = vmatmul.mubr.bf16.gmra.mrb[0].mxu0 %v1597
      %v1683 = vpop.f32.mrb[0].mxu0
      %v1684 = vadd.f32 0.0, %v1683
      %v1685 = vpop.f32.mrb[0].mxu0
      %v1686 = vpop.f32.mrb[0].mxu0
      %v1687 = vadd.f32 0.0, %v1686
      %v1688 = vpop.f32.mrb[0].mxu0
      %1689 = vmatprep.mubr.bf16.mxu0 0
      %1690 = vmatmul.mubr.bf16.gmra.mrb[0].mxu0 %v1600
      %v1691 = vpop.f32.mrb[0].mxu0
      %v1692 = vadd.f32 0.0, %v1691
      %v1693 = vpop.f32.mrb[0].mxu0
      %v1694 = vpop.f32.mrb[0].mxu0
      %v1695 = vadd.f32 0.0, %v1694
      %v1696 = vpop.f32.mrb[0].mxu0
      %1697 = vmatprep.mubr.bf16.mxu0 0
      %1698 = vmatmul.mubr.bf16.gmra.mrb[0].mxu0 %v1603
      %v1699 = vpop.f32.mrb[0].mxu0
      %v1700 = vadd.f32 0.0, %v1699
      %v1701 = vpop.f32.mrb[0].mxu0
      %v1702 = vpop.f32.mrb[0].mxu0
      %v1703 = vadd.f32 0.0, %v1702
      %v1704 = vpop.f32.mrb[0].mxu0
      %1705 = vdwg.mxu0
      %vm1706 = vcmask 392192
      %v1707 = vsel %vm1706, %v1644, -inf
      %v1708 = vrot.slane %v1707, 4
      %v1709 = vmax.f32 %v1707, %v1708
      %v1710 = vrot.slane %v1709, 2
      %v1711 = vmax.f32 %v1709, %v1710
      %v1712 = vrot.slane %v1711, 1
      %v1713 = vmax.f32 %v1711, %v1712
      %v1714 = vsel %vm1706, %v1647, -inf
      %v1715 = vrot.slane %v1714, 4
      %v1716 = vmax.f32 %v1714, %v1715
      %v1717 = vrot.slane %v1716, 2
      %v1718 = vmax.f32 %v1716, %v1717
      %v1719 = vrot.slane %v1718, 1
      %v1720 = vmax.f32 %v1718, %v1719
      %v1721 = vsel %vm1706, %v1652, -inf
      %v1722 = vrot.slane %v1721, 4
      %v1723 = vmax.f32 %v1721, %v1722
      %v1724 = vrot.slane %v1723, 2
      %v1725 = vmax.f32 %v1723, %v1724
      %v1726 = vrot.slane %v1725, 1
      %v1727 = vmax.f32 %v1725, %v1726
      %v1728 = vsel %vm1706, %v1655, -inf
      %v1729 = vrot.slane %v1728, 4
      %v1730 = vmax.f32 %v1728, %v1729
      %v1731 = vrot.slane %v1730, 2
      %v1732 = vmax.f32 %v1730, %v1731
      %v1733 = vrot.slane %v1732, 1
      %v1734 = vmax.f32 %v1732, %v1733
      %v1735 = vsel %vm1706, %v1660, -inf
      %v1736 = vrot.slane %v1735, 4
      %v1737 = vmax.f32 %v1735, %v1736
      %v1738 = vrot.slane %v1737, 2
      %v1739 = vmax.f32 %v1737, %v1738
      %v1740 = vrot.slane %v1739, 1
      %v1741 = vmax.f32 %v1739, %v1740
      %v1742 = vsel %vm1706, %v1663, -inf
      %v1743 = vrot.slane %v1742, 4
      %v1744 = vmax.f32 %v1742, %v1743
      %v1745 = vrot.slane %v1744, 2
      %v1746 = vmax.f32 %v1744, %v1745
      %v1747 = vrot.slane %v1746, 1
      %v1748 = vmax.f32 %v1746, %v1747
      %v1749 = vsel %vm1706, %v1668, -inf
      %v1750 = vrot.slane %v1749, 4
      %v1751 = vmax.f32 %v1749, %v1750
      %v1752 = vrot.slane %v1751, 2
      %v1753 = vmax.f32 %v1751, %v1752
      %v1754 = vrot.slane %v1753, 1
      %v1755 = vmax.f32 %v1753, %v1754
      %v1756 = vsel %vm1706, %v1671, -inf
      %v1757 = vrot.slane %v1756, 4
      %v1758 = vmax.f32 %v1756, %v1757
      %v1759 = vrot.slane %v1758, 2
      %v1760 = vmax.f32 %v1758, %v1759
      %v1761 = vrot.slane %v1760, 1
      %v1762 = vmax.f32 %v1760, %v1761
      %v1763 = vsel %vm1706, %v1676, -inf
      %v1764 = vrot.slane %v1763, 4
      %v1765 = vmax.f32 %v1763, %v1764
      %v1766 = vrot.slane %v1765, 2
      %v1767 = vmax.f32 %v1765, %v1766
      %v1768 = vrot.slane %v1767, 1
      %v1769 = vmax.f32 %v1767, %v1768
      %v1770 = vsel %vm1706, %v1679, -inf
      %v1771 = vrot.slane %v1770, 4
      %v1772 = vmax.f32 %v1770, %v1771
      %v1773 = vrot.slane %v1772, 2
      %v1774 = vmax.f32 %v1772, %v1773
      %v1775 = vrot.slane %v1774, 1
      %v1776 = vmax.f32 %v1774, %v1775
      %v1777 = vsel %vm1706, %v1684, -inf
      %v1778 = vrot.slane %v1777, 4
      %v1779 = vmax.f32 %v1777, %v1778
      %v1780 = vrot.slane %v1779, 2
      %v1781 = vmax.f32 %v1779, %v1780
      %v1782 = vrot.slane %v1781, 1
      %v1783 = vmax.f32 %v1781, %v1782
      %v1784 = vsel %vm1706, %v1687, -inf
      %v1785 = vrot.slane %v1784, 4
      %v1786 = vmax.f32 %v1784, %v1785
      %v1787 = vrot.slane %v1786, 2
      %v1788 = vmax.f32 %v1786, %v1787
      %v1789 = vrot.slane %v1788, 1
      %v1790 = vmax.f32 %v1788, %v1789
      %v1791 = vsel %vm1706, %v1692, -inf
      %v1792 = vrot.slane %v1791, 4
      %v1793 = vmax.f32 %v1791, %v1792
      %v1794 = vrot.slane %v1793, 2
      %v1795 = vmax.f32 %v1793, %v1794
      %v1796 = vrot.slane %v1795, 1
      %v1797 = vmax.f32 %v1795, %v1796
      %v1798 = vsel %vm1706, %v1695, -inf
      %v1799 = vrot.slane %v1798, 4
      %v1800 = vmax.f32 %v1798, %v1799
      %v1801 = vrot.slane %v1800, 2
      %v1802 = vmax.f32 %v1800, %v1801
      %v1803 = vrot.slane %v1802, 1
      %v1804 = vmax.f32 %v1802, %v1803
      %v1805 = vsel %vm1706, %v1700, -inf
      %v1806 = vrot.slane %v1805, 4
      %v1807 = vmax.f32 %v1805, %v1806
      %v1808 = vrot.slane %v1807, 2
      %v1809 = vmax.f32 %v1807, %v1808
      %v1810 = vrot.slane %v1809, 1
      %v1811 = vmax.f32 %v1809, %v1810
      %v1812 = vsel %vm1706, %v1703, -inf
      %v1813 = vrot.slane %v1812, 4
      %v1814 = vmax.f32 %v1812, %v1813
      %v1815 = vrot.slane %v1814, 2
      %v1816 = vmax.f32 %v1814, %v1815
      %v1817 = vrot.slane %v1816, 1
      %v1818 = vmax.f32 %v1816, %v1817
      %v1819 = vld [vmem:[%s7] sm:$0x1]
      %v1821 = vlaneseq
      %v1822 = vshrl.u32 %v1821, 7
      %v1823 = vsub.s32 0, %v1822
      %v1824 = vrot.slane %v1819, %v1823
      %v1826 = vmul.f32 %v1713, %v1824
      %v1827 = vmul.f32 %v1720, %v1824
      %v1828 = vmul.f32 %v1727, %v1824
      %v1829 = vmul.f32 %v1734, %v1824
      %v1830 = vmul.f32 %v1741, %v1824
      %v1831 = vmul.f32 %v1748, %v1824
      %v1832 = vmul.f32 %v1755, %v1824
      %v1833 = vmul.f32 %v1762, %v1824
      %v1834 = vmul.f32 %v1769, %v1824
      %v1835 = vmul.f32 %v1776, %v1824
      %v1836 = vmul.f32 %v1783, %v1824
      %v1837 = vmul.f32 %v1790, %v1824
      %v1838 = vmul.f32 %v1797, %v1824
      %v1839 = vmul.f32 %v1804, %v1824
      %v1840 = vmul.f32 %v1811, %v1824
      %v1841 = vmul.f32 %v1818, %v1824
      %v1842 = vld [vmem:[%s8] sm:$0x1]
      %v1844 = vlaneseq
      %v1845 = vshrl.u32 %v1844, 7
      %v1846 = vsub.s32 0, %v1845
      %v1847 = vrot.slane %v1842, %v1846
      %v1849 = vadd.f32 %v1826, %v1847
      %v1850 = vadd.f32 %v1827, %v1847
      %v1851 = vadd.f32 %v1828, %v1847
      %v1852 = vadd.f32 %v1829, %v1847
      %v1853 = vadd.f32 %v1830, %v1847
      %v1854 = vadd.f32 %v1831, %v1847
      %v1855 = vadd.f32 %v1832, %v1847
      %v1856 = vadd.f32 %v1833, %v1847
      %v1857 = vadd.f32 %v1834, %v1847
      %v1858 = vadd.f32 %v1835, %v1847
      %v1859 = vadd.f32 %v1836, %v1847
      %v1860 = vadd.f32 %v1837, %v1847
      %v1861 = vadd.f32 %v1838, %v1847
      %v1862 = vadd.f32 %v1839, %v1847
      %v1863 = vadd.f32 %v1840, %v1847
      %v1864 = vadd.f32 %v1841, %v1847
      %v1865 = vld [vmem:[%s9] sm:$0xf]
      %v1866 = vld [vmem:[%s9 + $0x4] sm:$0xf]
      %v1867 = vpack.c.bf16 %v1713, %v1713
      %v1868 = vpack.c.bf16 %v1720, %v1720
      %v1869 = vpack.c.bf16 %v1727, %v1727
      %v1870 = vpack.c.bf16 %v1734, %v1734
      %v1871 = vpack.c.bf16 %v1741, %v1741
      %v1872 = vpack.c.bf16 %v1748, %v1748
      %v1873 = vpack.c.bf16 %v1755, %v1755
      %v1874 = vpack.c.bf16 %v1762, %v1762
      %v1875 = vpack.c.bf16 %v1769, %v1769
      %v1876 = vpack.c.bf16 %v1776, %v1776
      %v1877 = vpack.c.bf16 %v1783, %v1783
      %v1878 = vpack.c.bf16 %v1790, %v1790
      %v1879 = vpack.c.bf16 %v1797, %v1797
      %v1880 = vpack.c.bf16 %v1804, %v1804
      %v1881 = vpack.c.bf16 %v1811, %v1811
      %v1882 = vpack.c.bf16 %v1818, %v1818
      %v1899 = vunpack.c.l.b16 %v1867
      %v1900 = vunpack.c.l.b16 %v1868
      %v1901 = vunpack.c.l.b16 %v1869
      %v1902 = vunpack.c.l.b16 %v1870
      %v1903 = vunpack.c.l.b16 %v1871
      %v1904 = vunpack.c.l.b16 %v1872
      %v1905 = vunpack.c.l.b16 %v1873
      %v1906 = vunpack.c.l.b16 %v1874
      %v1907 = vunpack.c.l.b16 %v1875
      %v1908 = vunpack.c.l.b16 %v1876
      %v1909 = vunpack.c.l.b16 %v1877
      %v1910 = vunpack.c.l.b16 %v1878
      %v1911 = vunpack.c.l.b16 %v1879
      %v1912 = vunpack.c.l.b16 %v1880
      %v1913 = vunpack.c.l.b16 %v1881
      %v1914 = vunpack.c.l.b16 %v1882
      %vm1915 = vcmask 1041409
      %v1916 = vsel %vm1915, %v1900, %v1899
      %vm1917 = vcmask 1042434
      %v1918 = vsel %vm1917, %v1901, %v1916
      %vm1919 = vcmask 1043459
      %v1920 = vsel %vm1919, %v1902, %v1918
      %vm1921 = vcmask 1044484
      %v1922 = vsel %vm1921, %v1903, %v1920
      %vm1923 = vcmask 1045509
      %v1924 = vsel %vm1923, %v1904, %v1922
      %vm1925 = vcmask 1046534
      %v1926 = vsel %vm1925, %v1905, %v1924
      %vm1927 = vcmask 1047559
      %v1928 = vsel %vm1927, %v1906, %v1926
      %v1929 = vsel %vm1915, %v1908, %v1907
      %v1930 = vsel %vm1917, %v1909, %v1929
      %v1931 = vsel %vm1919, %v1910, %v1930
      %v1932 = vsel %vm1921, %v1911, %v1931
      %v1933 = vsel %vm1923, %v1912, %v1932
      %v1934 = vsel %vm1925, %v1913, %v1933
      %v1935 = vsel %vm1927, %v1914, %v1934
      %v1936 = vpack.c.b16 %v1935, %v1928
      %1937 = vrot.lane.b32.xlu0 %v1936, 96
      %v1938 = vpop.permute.xlu0 %1937
      %v1941 = vunpack.c.l.b16 %v1865
      %v1942 = vunpack.c.l.b16 %v1866
      %v1943 = vpack.c.b16 %v1942, %v1941
      %vm1945 = vcmask 130048
      %v1947 = vsel %vm1945, %v1938, 0
      %1949 = vmatprep.subr.bf16.mxu0 0
      %1950 = vmatpush1.bf16.msra.mxu0 %v1943
      %1951 = vmatprep.subr.bf16.mxu0 0
      %1952 = vmatpush1.bf16.msra.mxu0 0
      %1953 = vmatprep.subr.bf16.mxu0 0
      %1954 = vmatpush1.bf16.msra.mxu0 0
      %1955 = vmatprep.subr.bf16.mxu0 0
      %1956 = vmatpush1.bf16.msra.mxu0 0
      %1957 = vmatprep.subr.bf16.mxu0 0
      %1958 = vmatpush1.bf16.msra.mxu0 0
      %1959 = vmatprep.subr.bf16.mxu0 0
      %1960 = vmatpush1.bf16.msra.mxu0 0
      %1961 = vmatprep.subr.bf16.mxu0 0
      %1962 = vmatpush1.bf16.msra.mxu0 0
      %1963 = vmatprep.subr.bf16.mxu0 0
      %1964 = vmatpush1.bf16.msra.mxu0 0
      %1965 = vmatprep.subr.bf16.mxu0 0
      %1966 = vmatpush1.bf16.msra.mxu0 0
      %1967 = vmatprep.subr.bf16.mxu0 0
      %1968 = vmatpush1.bf16.msra.mxu0 0
      %1969 = vmatprep.subr.bf16.mxu0 0
      %1970 = vmatpush1.bf16.msra.mxu0 0
      %1971 = vmatprep.subr.bf16.mxu0 0
      %1972 = vmatpush1.bf16.msra.mxu0 0
      %1973 = vmatprep.subr.bf16.mxu0 0
      %1974 = vmatpush1.bf16.msra.mxu0 0
      %1975 = vmatprep.subr.bf16.mxu0 0
      %1976 = vmatpush1.bf16.msra.mxu0 0
      %1977 = vmatprep.subr.bf16.mxu0 0
      %1978 = vmatpush1.bf16.msra.mxu0 0
      %1979 = vmatprep.subr.bf16.mxu0 0
      %1980 = vmatpush1.bf16.msra.mxu0 0
      %1981 = vmatprep.mubr.bf16.mxu0 0
      %1982 = vmatmul.mubr.bf16.gmra.mrb[0].mxu0 %v1947
      %v1983 = vpop.f32.mrb[0].mxu0
      %v1984 = vadd.f32 0.0, %v1983
      %v1985 = vpop.f32.mrb[0].mxu0
      %v1986 = vpop.f32.mrb[0].mxu0
      %v1987 = vadd.f32 0.0, %v1986
      %v1988 = vpop.f32.mrb[0].mxu0
      %1989 = vdwg.mxu0
      %v1990 = vld [vmem:[%s10] sm:$0xf]
      %v1991 = vld [vmem:[%s10 + $0x4] sm:$0xf]
      %v1992 = vld [vmem:[%s10 + $0x8] sm:$0xf]
      %v1993 = vld [vmem:[%s10 + $0xc] sm:$0xf]
      %v1994 = vpack.c.bf16 %v1849, %v1849
      %v1995 = vpack.c.bf16 %v1850, %v1850
      %v1996 = vpack.c.bf16 %v1851, %v1851
      %v1997 = vpack.c.bf16 %v1852, %v1852
      %v1998 = vpack.c.bf16 %v1853, %v1853
      %v1999 = vpack.c.bf16 %v1854, %v1854
      %v2000 = vpack.c.bf16 %v1855, %v1855
      %v2001 = vpack.c.bf16 %v1856, %v1856
      %v2002 = vpack.c.bf16 %v1857, %v1857
      %v2003 = vpack.c.bf16 %v1858, %v1858
      %v2004 = vpack.c.bf16 %v1859, %v1859
      %v2005 = vpack.c.bf16 %v1860, %v1860
      %v2006 = vpack.c.bf16 %v1861, %v1861
      %v2007 = vpack.c.bf16 %v1862, %v1862
      %v2008 = vpack.c.bf16 %v1863, %v1863
      %v2009 = vpack.c.bf16 %v1864, %v1864
      %v2010 = vld [vmem:[%s11] sm:$0x1]
      %v2012 = vlaneseq
      %v2013 = vshrl.u32 %v2012, 7
      %v2014 = vsub.s32 0, %v2013
      %v2015 = vrot.slane %v2010, %v2014
      %v2033 = vunpack.c.l.b16 %v1994
      %v2034 = vunpack.c.l.b16 %v1995
      %v2035 = vunpack.c.l.b16 %v1996
      %v2036 = vunpack.c.l.b16 %v1997
      %v2037 = vunpack.c.l.b16 %v1998
      %v2038 = vunpack.c.l.b16 %v1999
      %v2039 = vunpack.c.l.b16 %v2000
      %v2040 = vunpack.c.l.b16 %v2001
      %v2041 = vunpack.c.l.b16 %v2002
      %v2042 = vunpack.c.l.b16 %v2003
      %v2043 = vunpack.c.l.b16 %v2004
      %v2044 = vunpack.c.l.b16 %v2005
      %v2045 = vunpack.c.l.b16 %v2006
      %v2046 = vunpack.c.l.b16 %v2007
      %v2047 = vunpack.c.l.b16 %v2008
      %v2048 = vunpack.c.l.b16 %v2009
      %v2049 = vrot.slane %v2034, 7
      %v2050 = vsel %vm1915, %v2049, %v2033
      %v2051 = vrot.slane %v2035, 6
      %v2052 = vsel %vm1917, %v2051, %v2050
      %v2053 = vrot.slane %v2036, 5
      %v2054 = vsel %vm1919, %v2053, %v2052
      %v2055 = vrot.slane %v2037, 4
      %v2056 = vsel %vm1921, %v2055, %v2054
      %v2057 = vrot.slane %v2038, 3
      %v2058 = vsel %vm1923, %v2057, %v2056
      %v2059 = vrot.slane %v2039, 2
      %v2060 = vsel %vm1925, %v2059, %v2058
      %v2061 = vrot.slane %v2040, 1
      %v2062 = vsel %vm1927, %v2061, %v2060
      %v2063 = vrot.slane %v2042, 7
      %v2064 = vsel %vm1915, %v2063, %v2041
      %v2065 = vrot.slane %v2043, 6
      %v2066 = vsel %vm1917, %v2065, %v2064
      %v2067 = vrot.slane %v2044, 5
      %v2068 = vsel %vm1919, %v2067, %v2066
      %v2069 = vrot.slane %v2045, 4
      %v2070 = vsel %vm1921, %v2069, %v2068
      %v2071 = vrot.slane %v2046, 3
      %v2072 = vsel %vm1923, %v2071, %v2070
      %v2073 = vrot.slane %v2047, 2
      %v2074 = vsel %vm1925, %v2073, %v2072
      %v2075 = vrot.slane %v2048, 1
      %v2076 = vsel %vm1927, %v2075, %v2074
      %v2077 = vpack.c.b16 %v2076, %v2062
      %v2082 = vunpack.c.l.b16 %v1990
      %v2083 = vunpack.c.l.b16 %v1991
      %v2084 = vunpack.c.l.b16 %v1992
      %v2085 = vunpack.c.l.b16 %v1993
      %v2086 = vpack.c.b16 %v2083, %v2082
      %v2087 = vpack.c.b16 %v2085, %v2084
      %vm2090 = vcmask 261120
      %v2092 = vsel %vm2090, %v2077, 0
      %2094 = vmatprep.subr.bf16.mxu0 0
      %2095 = vmatpush1.bf16.msra.mxu0 %v2086
      %2096 = vmatprep.subr.bf16.mxu0 0
      %2097 = vmatpush1.bf16.msra.mxu0 %v2087
      %2098 = vmatprep.subr.bf16.mxu0 0
      %2099 = vmatpush1.bf16.msra.mxu0 0
      %2100 = vmatprep.subr.bf16.mxu0 0
      %2101 = vmatpush1.bf16.msra.mxu0 0
      %2102 = vmatprep.subr.bf16.mxu0 0
      %2103 = vmatpush1.bf16.msra.mxu0 0
      %2104 = vmatprep.subr.bf16.mxu0 0
      %2105 = vmatpush1.bf16.msra.mxu0 0
      %2106 = vmatprep.subr.bf16.mxu0 0
      %2107 = vmatpush1.bf16.msra.mxu0 0
      %2108 = vmatprep.subr.bf16.mxu0 0
      %2109 = vmatpush1.bf16.msra.mxu0 0
      %2110 = vmatprep.subr.bf16.mxu0 0
      %2111 = vmatpush1.bf16.msra.mxu0 0
      %2112 = vmatprep.subr.bf16.mxu0 0
      %2113 = vmatpush1.bf16.msra.mxu0 0
      %2114 = vmatprep.subr.bf16.mxu0 0
      %2115 = vmatpush1.bf16.msra.mxu0 0
      %2116 = vmatprep.subr.bf16.mxu0 0
      %2117 = vmatpush1.bf16.msra.mxu0 0
      %2118 = vmatprep.subr.bf16.mxu0 0
      %2119 = vmatpush1.bf16.msra.mxu0 0
      %2120 = vmatprep.subr.bf16.mxu0 0
      %2121 = vmatpush1.bf16.msra.mxu0 0
      %2122 = vmatprep.subr.bf16.mxu0 0
      %2123 = vmatpush1.bf16.msra.mxu0 0
      %2124 = vmatprep.subr.bf16.mxu0 0
      %2125 = vmatpush1.bf16.msra.mxu0 0
      %2126 = vmatprep.mubr.bf16.mxu0 0
      %2127 = vmatmul.mubr.bf16.gmra.mrb[0].mxu0 %v2092
      %v2128 = vpop.f32.mrb[0].mxu0
      %v2129 = vadd.f32 %v2015, %v2128
      %v2130 = vpop.f32.mrb[0].mxu0
      %v2131 = vpop.f32.mrb[0].mxu0
      %v2132 = vadd.f32 %v2015, %v2131
      %v2133 = vpop.f32.mrb[0].mxu0
      %2134 = vdwg.mxu0
      %v2135 = vmul.f32 %v2129, 0.5
      %v2136 = vmul.f32 %v2132, 0.5
      %v2137 = vmul.f32 %v2129, 0.044715
      %v2138 = vmul.f32 %v2132, 0.044715
      %v2139 = vmul.f32 %v2137, %v2129
      %v2140 = vmul.f32 %v2138, %v2132
      %v2141 = vmul.f32 %v2139, %v2129
      %v2142 = vmul.f32 %v2140, %v2132
      %v2143 = vadd.f32 %v2129, %v2141
      %v2144 = vadd.f32 %v2132, %v2142
      %v2145 = vmul.f32 %v2143, 0.7978846
      %v2146 = vmul.f32 %v2144, 0.7978846
      %v2147 = vtanh.pop %v2145
      %v2148 = vtanh.pop %v2146
      %v2149 = vadd.f32 %v2147, 1.0
      %v2150 = vadd.f32 %v2148, 1.0
      %v2151 = vmul.f32 %v2135, %v2149
      %v2152 = vmul.f32 %v2136, %v2150
      %v2153 = vld [vmem:[%s12] sm:$0xf]
      %v2154 = vld [vmem:[%s12 + $0x4] sm:$0xf]
      %v2155 = vld [vmem:[%s12 + $0x8] sm:$0xf]
      %v2156 = vld [vmem:[%s12 + $0xc] sm:$0xf]
      %v2157 = vld [vmem:[%s12 + $0x10] sm:$0xf]
      %v2158 = vld [vmem:[%s12 + $0x14] sm:$0xf]
      %v2159 = vld [vmem:[%s12 + $0x18] sm:$0xf]
      %v2160 = vld [vmem:[%s12 + $0x1c] sm:$0xf]
      %v2161 = vpack.c.bf16 %v2152, %v2151
      %v2170 = vunpack.c.l.b16 %v2153
      %v2171 = vunpack.c.l.b16 %v2154
      %v2172 = vunpack.c.l.b16 %v2155
      %v2173 = vunpack.c.l.b16 %v2156
      %v2174 = vunpack.c.l.b16 %v2157
      %v2175 = vunpack.c.l.b16 %v2158
      %v2176 = vunpack.c.l.b16 %v2159
      %v2177 = vunpack.c.l.b16 %v2160
      %v2178 = vpack.c.b16 %v2171, %v2170
      %v2179 = vpack.c.b16 %v2173, %v2172
      %v2180 = vpack.c.b16 %v2175, %v2174
      %v2181 = vpack.c.b16 %v2177, %v2176
      %vm2186 = vcmask 523264
      %v2188 = vsel %vm2186, %v2161, 0
      %2190 = vmatprep.subr.bf16.mxu0 0
      %2191 = vmatpush1.bf16.msra.mxu0 %v2178
      %2192 = vmatprep.subr.bf16.mxu0 0
      %2193 = vmatpush1.bf16.msra.mxu0 %v2179
      %2194 = vmatprep.subr.bf16.mxu0 0
      %2195 = vmatpush1.bf16.msra.mxu0 %v2180
      %2196 = vmatprep.subr.bf16.mxu0 0
      %2197 = vmatpush1.bf16.msra.mxu0 %v2181
      %2198 = vmatprep.subr.bf16.mxu0 0
      %2199 = vmatpush1.bf16.msra.mxu0 0
      %2200 = vmatprep.subr.bf16.mxu0 0
      %2201 = vmatpush1.bf16.msra.mxu0 0
      %2202 = vmatprep.subr.bf16.mxu0 0
      %2203 = vmatpush1.bf16.msra.mxu0 0
      %2204 = vmatprep.subr.bf16.mxu0 0
      %2205 = vmatpush1.bf16.msra.mxu0 0
      %2206 = vmatprep.subr.bf16.mxu0 0
      %2207 = vmatpush1.bf16.msra.mxu0 0
      %2208 = vmatprep.subr.bf16.mxu0 0
      %2209 = vmatpush1.bf16.msra.mxu0 0
      %2210 = vmatprep.subr.bf16.mxu0 0
      %2211 = vmatpush1.bf16.msra.mxu0 0
      %2212 = vmatprep.subr.bf16.mxu0 0
      %2213 = vmatpush1.bf16.msra.mxu0 0
      %2214 = vmatprep.subr.bf16.mxu0 0
      %2215 = vmatpush1.bf16.msra.mxu0 0
      %2216 = vmatprep.subr.bf16.mxu0 0
      %2217 = vmatpush1.bf16.msra.mxu0 0
      %2218 = vmatprep.subr.bf16.mxu0 0
      %2219 = vmatpush1.bf16.msra.mxu0 0
      %2220 = vmatprep.subr.bf16.mxu0 0
      %2221 = vmatpush1.bf16.msra.mxu0 0
      %2222 = vmatprep.mubr.bf16.mxu0 0
      %2223 = vmatmul.mubr.bf16.gmra.mrb[0].mxu0 %v2188
      %v2224 = vpop.f32.mrb[0].mxu0
      %v2225 = vadd.f32 0.0, %v2224
      %v2226 = vpop.f32.mrb[0].mxu0
      %v2227 = vpop.f32.mrb[0].mxu0
      %v2228 = vadd.f32 0.0, %v2227
      %v2229 = vpop.f32.mrb[0].mxu0
      %2230 = vdwg.mxu0
      %v2233 = vrot.slane %v2225, 1
      %v2234 = vrot.slane %v2225, 2
      %v2235 = vrot.slane %v2225, 3
      %v2236 = vrot.slane %v2225, 4
      %v2237 = vrot.slane %v2225, 5
      %v2238 = vrot.slane %v2225, 6
      %v2239 = vrot.slane %v2225, 7
      %v2240 = vrot.slane %v2228, 1
      %v2241 = vrot.slane %v2228, 2
      %v2242 = vrot.slane %v2228, 3
      %v2243 = vrot.slane %v2228, 4
      %v2244 = vrot.slane %v2228, 5
      %v2245 = vrot.slane %v2228, 6
      %v2246 = vrot.slane %v2228, 7
      %v2263 = vadd.f32 %v1849, %v2225
      %v2264 = vadd.f32 %v1850, %v2233
      %v2265 = vadd.f32 %v1851, %v2234
      %v2266 = vadd.f32 %v1852, %v2235
      %v2267 = vadd.f32 %v1853, %v2236
      %v2268 = vadd.f32 %v1854, %v2237
      %v2269 = vadd.f32 %v1855, %v2238
      %v2270 = vadd.f32 %v1856, %v2239
      %v2271 = vadd.f32 %v1857, %v2228
      %v2272 = vadd.f32 %v1858, %v2240
      %v2273 = vadd.f32 %v1859, %v2241
      %v2274 = vadd.f32 %v1860, %v2242
      %v2275 = vadd.f32 %v1861, %v2243
      %v2276 = vadd.f32 %v1862, %v2244
      %v2277 = vadd.f32 %v1863, %v2245
      %v2278 = vadd.f32 %v1864, %v2246
      %v2281 = vrot.slane %v1984, 1
      %v2282 = vrot.slane %v1984, 2
      %v2283 = vrot.slane %v1984, 3
      %v2284 = vrot.slane %v1984, 4
      %v2285 = vrot.slane %v1984, 5
      %v2286 = vrot.slane %v1984, 6
      %v2287 = vrot.slane %v1984, 7
      %v2288 = vrot.slane %v1987, 1
      %v2289 = vrot.slane %v1987, 2
      %v2290 = vrot.slane %v1987, 3
      %v2291 = vrot.slane %v1987, 4
      %v2292 = vrot.slane %v1987, 5
      %v2293 = vrot.slane %v1987, 6
      %v2294 = vrot.slane %v1987, 7
      %v2311 = vadd.f32 %v2263, %v1984
      %v2312 = vadd.f32 %v2264, %v2281
      %v2313 = vadd.f32 %v2265, %v2282
      %v2314 = vadd.f32 %v2266, %v2283
      %v2315 = vadd.f32 %v2267, %v2284
      %v2316 = vadd.f32 %v2268, %v2285
      %v2317 = vadd.f32 %v2269, %v2286
      %v2318 = vadd.f32 %v2270, %v2287
      %v2319 = vadd.f32 %v2271, %v1987
      %v2320 = vadd.f32 %v2272, %v2288
      %v2321 = vadd.f32 %v2273, %v2289
      %v2322 = vadd.f32 %v2274, %v2290
      %v2323 = vadd.f32 %v2275, %v2291
      %v2324 = vadd.f32 %v2276, %v2292
      %v2325 = vadd.f32 %v2277, %v2293
      %v2326 = vadd.f32 %v2278, %v2294
      %2327 = vst.msk [vmem:[%s582] sm:$0xff] %vm2090, %v1984
      %2328 = vst.msk [vmem:[%s582 + $0x8] sm:$0xff] %vm2090, %v1987
      %v2345 = vrot.slane %v2312, 7
      %v2346 = vsel %vm1915, %v2345, %v2311
      %v2347 = vrot.slane %v2313, 6
      %v2348 = vsel %vm1917, %v2347, %v2346
      %v2349 = vrot.slane %v2314, 5
      %v2350 = vsel %vm1919, %v2349, %v2348
      %v2351 = vrot.slane %v2315, 4
      %v2352 = vsel %vm1921, %v2351, %v2350
      %v2353 = vrot.slane %v2316, 3
      %v2354 = vsel %vm1923, %v2353, %v2352
      %v2355 = vrot.slane %v2317, 2
      %v2356 = vsel %vm1925, %v2355, %v2354
      %v2357 = vrot.slane %v2318, 1
      %v2358 = vsel %vm1927, %v2357, %v2356
      %v2359 = vrot.slane %v2320, 7
      %v2360 = vsel %vm1915, %v2359, %v2319
      %v2361 = vrot.slane %v2321, 6
      %v2362 = vsel %vm1917, %v2361, %v2360
      %v2363 = vrot.slane %v2322, 5
      %v2364 = vsel %vm1919, %v2363, %v2362
      %v2365 = vrot.slane %v2323, 4
      %v2366 = vsel %vm1921, %v2365, %v2364
      %v2367 = vrot.slane %v2324, 3
      %v2368 = vsel %vm1923, %v2367, %v2366
      %v2369 = vrot.slane %v2325, 2
      %v2370 = vsel %vm1925, %v2369, %v2368
      %v2371 = vrot.slane %v2326, 1
      %v2372 = vsel %vm1927, %v2371, %v2370
      %2375 = vst.msk [vmem:[%s588] sm:$0xff] %vm2090, %v2358
      %2376 = vst.msk [vmem:[%s588 + $0x8] sm:$0xff] %vm2090, %v2372
      %v2377 = vld [vmem:[%s13] sm:$0xf]
      %v2378 = vld [vmem:[%s13 + $0x4] sm:$0xf]
      %v2379 = vld [vmem:[%s13 + $0x8] sm:$0xf]
      %v2380 = vld [vmem:[%s13 + $0xc] sm:$0xf]
      %v2381 = vpack.c.bf16 %v2311, %v2311
      %v2382 = vpack.c.bf16 %v2312, %v2312
      %v2383 = vpack.c.bf16 %v2313, %v2313
      %v2384 = vpack.c.bf16 %v2314, %v2314
      %v2385 = vpack.c.bf16 %v2315, %v2315
      %v2386 = vpack.c.bf16 %v2316, %v2316
      %v2387 = vpack.c.bf16 %v2317, %v2317
      %v2388 = vpack.c.bf16 %v2318, %v2318
      %v2389 = vpack.c.bf16 %v2319, %v2319
      %v2390 = vpack.c.bf16 %v2320, %v2320
      %v2391 = vpack.c.bf16 %v2321, %v2321
      %v2392 = vpack.c.bf16 %v2322, %v2322
      %v2393 = vpack.c.bf16 %v2323, %v2323
      %v2394 = vpack.c.bf16 %v2324, %v2324
      %v2395 = vpack.c.bf16 %v2325, %v2325
      %v2396 = vpack.c.bf16 %v2326, %v2326
      %v2413 = vunpack.c.l.b16 %v2381
      %v2414 = vunpack.c.l.b16 %v2382
      %v2415 = vunpack.c.l.b16 %v2383
      %v2416 = vunpack.c.l.b16 %v2384
      %v2417 = vunpack.c.l.b16 %v2385
      %v2418 = vunpack.c.l.b16 %v2386
      %v2419 = vunpack.c.l.b16 %v2387
      %v2420 = vunpack.c.l.b16 %v2388
      %v2421 = vunpack.c.l.b16 %v2389
      %v2422 = vunpack.c.l.b16 %v2390
      %v2423 = vunpack.c.l.b16 %v2391
      %v2424 = vunpack.c.l.b16 %v2392
      %v2425 = vunpack.c.l.b16 %v2393
      %v2426 = vunpack.c.l.b16 %v2394
      %v2427 = vunpack.c.l.b16 %v2395
      %v2428 = vunpack.c.l.b16 %v2396
      %v2429 = vrot.slane %v2414, 7
      %v2430 = vsel %vm1915, %v2429, %v2413
      %v2431 = vrot.slane %v2415, 6
      %v2432 = vsel %vm1917, %v2431, %v2430
      %v2433 = vrot.slane %v2416, 5
      %v2434 = vsel %vm1919, %v2433, %v2432
      %v2435 = vrot.slane %v2417, 4
      %v2436 = vsel %vm1921, %v2435, %v2434
      %v2437 = vrot.slane %v2418, 3
      %v2438 = vsel %vm1923, %v2437, %v2436
      %v2439 = vrot.slane %v2419, 2
      %v2440 = vsel %vm1925, %v2439, %v2438
      %v2441 = vrot.slane %v2420, 1
      %v2442 = vsel %vm1927, %v2441, %v2440
      %v2443 = vrot.slane %v2422, 7
      %v2444 = vsel %vm1915, %v2443, %v2421
      %v2445 = vrot.slane %v2423, 6
      %v2446 = vsel %vm1917, %v2445, %v2444
      %v2447 = vrot.slane %v2424, 5
      %v2448 = vsel %vm1919, %v2447, %v2446
      %v2449 = vrot.slane %v2425, 4
      %v2450 = vsel %vm1921, %v2449, %v2448
      %v2451 = vrot.slane %v2426, 3
      %v2452 = vsel %vm1923, %v2451, %v2450
      %v2453 = vrot.slane %v2427, 2
      %v2454 = vsel %vm1925, %v2453, %v2452
      %v2455 = vrot.slane %v2428, 1
      %v2456 = vsel %vm1927, %v2455, %v2454
      %v2457 = vpack.c.b16 %v2456, %v2442
      %v2462 = vunpack.c.l.b16 %v2377
      %v2463 = vunpack.c.l.b16 %v2378
      %v2464 = vunpack.c.l.b16 %v2379
      %v2465 = vunpack.c.l.b16 %v2380
      %v2466 = vpack.c.b16 %v2463, %v2462
      %v2467 = vpack.c.b16 %v2465, %v2464
      %v2471 = vsel %vm2090, %v2457, 0
      %2473 = vmatprep.subr.bf16.mxu0 0
      %2474 = vmatpush1.bf16.msra.mxu0 %v2466
      %2475 = vmatprep.subr.bf16.mxu0 0
      %2476 = vmatpush1.bf16.msra.mxu0 %v2467
      %2477 = vmatprep.subr.bf16.mxu0 0
      %2478 = vmatpush1.bf16.msra.mxu0 0
      %2479 = vmatprep.subr.bf16.mxu0 0
      %2480 = vmatpush1.bf16.msra.mxu0 0
      %2481 = vmatprep.subr.bf16.mxu0 0
      %2482 = vmatpush1.bf16.msra.mxu0 0
      %2483 = vmatprep.subr.bf16.mxu0 0
      %2484 = vmatpush1.bf16.msra.mxu0 0
      %2485 = vmatprep.subr.bf16.mxu0 0
      %2486 = vmatpush1.bf16.msra.mxu0 0
      %2487 = vmatprep.subr.bf16.mxu0 0
      %2488 = vmatpush1.bf16.msra.mxu0 0
      %2489 = vmatprep.subr.bf16.mxu0 0
      %2490 = vmatpush1.bf16.msra.mxu0 0
      %2491 = vmatprep.subr.bf16.mxu0 0
      %2492 = vmatpush1.bf16.msra.mxu0 0
      %2493 = vmatprep.subr.bf16.mxu0 0
      %2494 = vmatpush1.bf16.msra.mxu0 0
      %2495 = vmatprep.subr.bf16.mxu0 0
      %2496 = vmatpush1.bf16.msra.mxu0 0
      %2497 = vmatprep.subr.bf16.mxu0 0
      %2498 = vmatpush1.bf16.msra.mxu0 0
      %2499 = vmatprep.subr.bf16.mxu0 0
      %2500 = vmatpush1.bf16.msra.mxu0 0
      %2501 = vmatprep.subr.bf16.mxu0 0
      %2502 = vmatpush1.bf16.msra.mxu0 0
      %2503 = vmatprep.subr.bf16.mxu0 0
      %2504 = vmatpush1.bf16.msra.mxu0 0
      %2505 = vmatprep.mubr.bf16.mxu0 0
      %2506 = vmatmul.mubr.bf16.gmra.mrb[0].mxu0 %v2471
      %v2507 = vpop.f32.mrb[0].mxu0
      %v2508 = vadd.f32 0.0, %v2507
      %v2509 = vpop.f32.mrb[0].mxu0
      %v2510 = vpop.f32.mrb[0].mxu0
      %v2511 = vadd.f32 0.0, %v2510
      %v2512 = vpop.f32.mrb[0].mxu0
      %2513 = vdwg.mxu0
      %v2514 = vpack.c.bf16 %v2511, %v2508
      %v2516 = vunpack.c.l.b16 %v2514
      %v2517 = vunpack.c.h.b16 %v2514
      %v2518 = vpack.c.b16 %v2516, %v2516
      %v2519 = vpack.c.b16 %v2517, %v2517
      %vm2522 = vcmask 257024
      %2523 = vst.msk [vmem:[%s594] sm:$0xf] %vm2522, %v2518
      %2524 = vst.msk [vmem:[%s594 + $0x4] sm:$0xf] %vm2522, %v2519
      %s2525 = smul.u32 2, %s28
      %p2526 = scmp.lt.s32.totalorder %s2525, 7
      %s2527 = scalar_select %p2526, %s2525, 7
      %s2528 = smul.addr %s2527, 8
      %s2529 = scalar_lea.vmem %s14, %s2528
      %s2530 = smul.u32 2, %s28
      %p2531 = scmp.lt.s32.totalorder %s2530, 7
      %s2532 = scalar_select %p2531, %s2530, 7
      %s2533 = smul.addr %s2532, 8
      %s2534 = scalar_lea.vmem %s15, %s2533
      %s2535 = smul.u32 2, %s28
      %p2536 = scmp.lt.s32.totalorder %s2535, 7
      %s2537 = scalar_select %p2536, %s2535, 7
      %s2538 = smul.addr %s2537, 4
      %s2539 = scalar_lea.vmem %s16, %s2538
      // Predicated region
      $region77: #{tpu_custom_call.1} parent=75 // pred_check
        %p2540 = pneg %p355
      $region78: #{tpu_custom_call.1} parent=75 // pred_check_branch
        %2542 = sbr.rel (%p2540) target = $region80
      $region79: #{tpu_custom_call.1} parent=75 // pred_region
        %s2543 = smul.u32 2, %s28
      $region80: #{tpu_custom_call.1} parent=75 // pred_fallthru
        _
      // Predicated region
      $region81: #{tpu_custom_call.1} parent=75 // pred_check
        %p2544 = pneg %p381
      $region82: #{tpu_custom_call.1} parent=75 // pred_check_branch
        %2546 = sbr.rel (%p2544) target = $region84
      $region83: #{tpu_custom_call.1} parent=75 // pred_region
        %s2547 = smul.u32 2, %s28
      $region84: #{tpu_custom_call.1} parent=75 // pred_fallthru
        _
      // Predicated region
      $region85: #{tpu_custom_call.1} parent=75 // pred_check
        %p2548 = pneg %p407
      $region86: #{tpu_custom_call.1} parent=75 // pred_check_branch
        %2550 = sbr.rel (%p2548) target = $region88
      $region87: #{tpu_custom_call.1} parent=75 // pred_region
        %s2551 = smul.u32 2, %s28
      $region88: #{tpu_custom_call.1} parent=75 // pred_fallthru
        _
    $region76: #{tpu_custom_call.1} parent=5 // pred_fallthru
      _
    %p2552 = scmp.le.s32.totalorder 2, %s23
    // Predicated region
    $region89: #{tpu_custom_call.1} parent=5 // pred_check
      %p2553 = pneg %p2552
    $region90: #{tpu_custom_call.1} parent=5 // pred_check_branch
      %2555 = sbr.rel (%p2553) target = $region92
    $region91: #{tpu_custom_call.1} parent=5 // pred_region
      %s2556 = ssub.s32 %s23, 2
      // Predicated region
      $region93: #{tpu_custom_call.1} parent=91 // pred_check
        %p2557 = pneg %p361
      $region94: #{tpu_custom_call.1} parent=91 // pred_check_branch
        %2559 = sbr.rel (%p2557) target = $region96
      $region95: #{tpu_custom_call.1} parent=91 // pred_region
        %s2560 = smul.u32 2, %s29
        %p2561 = scmp.lt.s32.totalorder %s2560, 7
        %s2562 = scalar_select %p2561, %s2560, 7
        %s2563 = smul.addr %s2562, 8
        %s2564 = scalar_lea.vmem %s14, %s2563
      $region96: #{tpu_custom_call.1} parent=91 // pred_fallthru
        _
      // Predicated region
      $region97: #{tpu_custom_call.1} parent=91 // pred_check
        %p2565 = pneg %p387
      $region98: #{tpu_custom_call.1} parent=91 // pred_check_branch
        %2567 = sbr.rel (%p2565) target = $region100
      $region99: #{tpu_custom_call.1} parent=91 // pred_region
        %s2568 = smul.u32 2, %s29
        %p2569 = scmp.lt.s32.totalorder %s2568, 7
        %s2570 = scalar_select %p2569, %s2568, 7
        %s2571 = smul.addr %s2570, 8
        %s2572 = scalar_lea.vmem %s15, %s2571
      $region100: #{tpu_custom_call.1} parent=91 // pred_fallthru
        _
      // Predicated region
      $region101: #{tpu_custom_call.1} parent=91 // pred_check
        %p2573 = pneg %p413
      $region102: #{tpu_custom_call.1} parent=91 // pred_check_branch
        %2575 = sbr.rel (%p2573) target = $region104
      $region103: #{tpu_custom_call.1} parent=91 // pred_region
        %s2576 = smul.u32 2, %s29
        %p2577 = scmp.lt.s32.totalorder %s2576, 7
        %s2578 = scalar_select %p2577, %s2576, 7
        %s2579 = smul.addr %s2578, 4
        %s2580 = scalar_lea.vmem %s16, %s2579
      $region104: #{tpu_custom_call.1} parent=91 // pred_fallthru
        _
    $region92: #{tpu_custom_call.1} parent=5 // pred_fallthru
      _
  $region6: #{tpu_custom_call.1} parent=0 // loop_footer
    %s27 = sadd.s32 1, %s23
  $region7: #{tpu_custom_call.1} parent=0 // loop_footer_branch
    %22 = sbr.rel target = $region3
  $region8: #{tpu_custom_call.1} parent=0 // loop_exit
    _

</llo_original>
